<compile_context>
chip_gen: v5e
topology: v5e:2x2
jax: 0.10.0
libtpu: 0.0.40
codegen_flags: <defaults>
</compile_context>

<pallas_src>
from functools import partial

import jax
import jax.numpy as jnp
from jax.experimental import pallas as pl
from jax.experimental.pallas import tpu as pltpu


_SQRT_2_OVER_PI = 0.7978845608028654


def _gelu(x):
    # tanh-approx GELU (EUP slot); close to torch.nn.GELU() (exact erf) to ~3e-4 abs.
    return 0.5 * x * (1.0 + jnp.tanh(_SQRT_2_OVER_PI * (x + 0.044715 * x * x * x)))


def gru_gelu_scan_kernel(gx_ref, whh_ref, bhn_ref, o_ref, h_ref, *, tt, hidden, reverse):
    """Runs TT GRU time steps (+ GELU on each emitted hidden state) for one
    (batch-block, time-block) grid cell.

    gx_ref : (TB, TT, 3C) bf16  precomputed x-projection + folded biases [r|z|n]
    whh_ref: (C, 3C)      bf16  fused hidden weights (loop-invariant)
    bhn_ref: (1, C)       f32   b_hn (must stay inside the r gate)
    o_ref  : (TB, TT, C)        output block, gelu(h_t)
    h_ref  : (TB, C)      f32   VMEM scratch, hidden state carried across time blocks
    """
    C = hidden

    @pl.when(pl.program_id(1) == 0)
    def _():
        h_ref[...] = jnp.zeros_like(h_ref)

    w = whh_ref[...]                              # (C, 3C) bf16, hoisted out of the loop
    b_hn = bhn_ref[...].astype(jnp.float32)       # (1, C)

    h = h_ref[...]                                # (TB, C) f32
    for i in range(tt):                           # full static unroll of the time block
        s = (tt - 1 - i) if reverse else i        # static in-block time index
        gx = gx_ref[:, s, :].astype(jnp.float32)  # (TB, 3C)
        gh = jnp.dot(h.astype(jnp.bfloat16), w,
                     preferred_element_type=jnp.float32)  # one fused MXU dot -> (TB, 3C)

        r = jax.nn.sigmoid(gx[:, :C] + gh[:, :C])
        z = jax.nn.sigmoid(gx[:, C:2 * C] + gh[:, C:2 * C])
        n = jnp.tanh(gx[:, 2 * C:] + r * (gh[:, 2 * C:] + b_hn))
        h = (1.0 - z) * n + z * h

        o_ref[:, s, :] = _gelu(h).astype(o_ref.dtype)

    h_ref[...] = h


def _pick_time_block(T, max_tt=32):
    """Largest multiple of 8 that divides T and is <= max_tt; else the full T
    (block dim == array dim always satisfies the (8,128) layout rule)."""
    best = T
    for tt in range(8, min(T, max_tt) + 1, 8):
        if T % tt == 0:
            best = tt
    return best


def _gru_gelu_pass(gx, whh_all, b_hn, *, reverse, time_block=32, batch_block=None):
    """One full GRU direction over precomputed gate pre-activations gx: (B, T, 3C)."""
    B, T, G = gx.shape
    C = G // 3
    TT = _pick_time_block(T, time_block)
    TB = B if batch_block is None else batch_block
    nb, nt = B // TB, T // TT

    if reverse:
        idx = lambda b, t: (b, nt - 1 - t, 0)
    else:
        idx = lambda b, t: (b, t, 0)

    kernel = partial(gru_gelu_scan_kernel, tt=TT, hidden=C, reverse=reverse)

    return pl.pallas_call(
        kernel,
        out_shape=jax.ShapeDtypeStruct((B, T, C), jnp.float32),
        grid_spec=pltpu.PrefetchScalarGridSpec(
            num_scalar_prefetch=0,
            grid=(nb, nt),
            in_specs=[
                pl.BlockSpec((TB, TT, 3 * C), idx),            # streamed gate pre-acts
                pl.BlockSpec((C, 3 * C), lambda b, t: (0, 0)),  # loop-invariant weights
                pl.BlockSpec((1, C), lambda b, t: (0, 0)),      # b_hn
            ],
            out_specs=pl.BlockSpec((TB, TT, C), idx),
            scratch_shapes=[pltpu.VMEM((TB, C), jnp.float32)],
        ),
        compiler_params=pltpu.CompilerParams(
            # batch blocks are independent (v7x megacore); the time axis is sequential
            dimension_semantics=("parallel", "arbitrary"),
        ),
    )(gx, whh_all, b_hn)


def _input_projection(x_btc, wih_all, b_fold):
    """Hoisted x-projection for ALL time steps: one big (B*T, C) x (C, 3C) matmul."""
    gx = jnp.einsum(
        "btc,cg->btg",
        x_btc.astype(jnp.bfloat16),
        wih_all,
        preferred_element_type=jnp.float32,
    )
    return (gx + b_fold).astype(jnp.bfloat16)


def init_bgru_params(key, channel):
    """Matches the PyTorch module's __init_weight: kaiming_normal_ (fan_in=C, gain
    sqrt(2)) for weight_ih/weight_hh, zero biases. Repacked for the kernel:
      wih_all, whh_all : (C, 3C) bf16, columns ordered [r | z | n]
      b_fold           : (3C,)  f32, b_ih + [b_hr, b_hz, 0] folded into the x-projection
      b_hn             : (1, C) f32, stays separate (sits inside the r gate)
    """
    C = channel
    std = (2.0 / C) ** 0.5
    keys = jax.random.split(key, 4)

    def one_gru(k_ih, k_hh):
        w_ih = jax.random.normal(k_ih, (3 * C, C), jnp.float32) * std   # torch [r;z;n]
        w_hh = jax.random.normal(k_hh, (3 * C, C), jnp.float32) * std
        b_ih = jnp.zeros((3 * C,), jnp.float32)
        b_hh = jnp.zeros((3 * C,), jnp.float32)

        wih_all = w_ih.T.astype(jnp.bfloat16)                           # (C, 3C)
        whh_all = w_hh.T.astype(jnp.bfloat16)                           # (C, 3C)
        b_fold = b_ih + jnp.concatenate([b_hh[:2 * C], jnp.zeros((C,), jnp.float32)])
        b_hn = b_hh[2 * C:].reshape(1, C)
        return wih_all, whh_all, b_fold, b_hn

    return one_gru(keys[0], keys[1]), one_gru(keys[2], keys[3])


def bgru_forward(x_btc, params):
    """Equivalent of BGRU.forward. x_btc: (B, T, C) float32 -> (B, T, C) float32."""
    (wih_f, whh_f, bx_f, bhn_f), (wih_b, whh_b, bx_b, bhn_b) = params
    x = x_btc.astype(jnp.float32)

    # x -> gru_forward -> gelu (input projection hoisted out of the recurrence)
    gx1 = _input_projection(x, wih_f, bx_f)
    y1 = _gru_gelu_pass(gx1, whh_f, bhn_f, reverse=False)

    # flip(time) -> gru_backward -> flip(time) -> gelu, via reversed traversal
    gx2 = _input_projection(y1, wih_b, bx_b)
    y2 = _gru_gelu_pass(gx2, whh_b, bhn_b, reverse=True)
    return y2


if __name__ == "__main__":
    B, T, C = 2, 8, 32   # batch=2, seq=8, channel=32

    key = jax.random.PRNGKey(0)
    k_x, k_p = jax.random.split(key)
    x = jax.random.normal(k_x, (B, T, C), jnp.float32)
    params = init_bgru_params(k_p, C)

    out = bgru_forward(x, params)
    out = jax.block_until_ready(out)
    assert out.shape == (B, T, C) and out.dtype == jnp.float32
    print("KERNEL_OK")
</pallas_src>

<mosaic_0001>
module attributes {stable_mosaic.version = 11 : i64} {
  func.func @gru_gelu_scan_kernel(%arg0: i32, %arg1: i32, %arg2: memref<2x8x96xbf16, #tpu.memory_space<vmem>>, %arg3: memref<32x96xbf16, #tpu.memory_space<vmem>>, %arg4: memref<1x32xf32, #tpu.memory_space<vmem>>, %arg5: memref<2x8x32xf32, #tpu.memory_space<vmem>>, %arg6: memref<2x32xf32, #tpu.memory_space<vmem>>) attributes {dimension_semantics = [#tpu.dimension_semantics<parallel>, #tpu.dimension_semantics<arbitrary>], iteration_bounds = array<i64: 1, 1>, scalar_prefetch = 0 : i64, scratch_operands = 1 : i64, tpu.core_type = #tpu.core_type<tc>, window_params = [{transform_indices = @transform_0, window_bounds = array<i64: 2, 8, 96>}, {pipeline_mode = #tpu.pipeline_mode<synchronous>, transform_indices = @transform_1, window_bounds = array<i64: 32, 96>}, {pipeline_mode = #tpu.pipeline_mode<synchronous>, transform_indices = @transform_2, window_bounds = array<i64: 1, 32>}, {transform_indices = @transform_3, window_bounds = array<i64: 2, 8, 32>}]} {
    %c0_i32 = arith.constant 0 : i32
    %0 = arith.cmpi eq, %arg1, %c0_i32 : i32
    %1 = arith.extui %0 : i1 to i32
    %c0_i32_0 = arith.constant 0 : i32
    %2 = arith.cmpi ne, %1, %c0_i32_0 : i32
    scf.if %2 {
      %cst_112 = arith.constant 0.000000e+00 : f32
      %399 = vector.broadcast %cst_112 : f32 to vector<2x32xf32>
      %c0_113 = arith.constant 0 : index
      %c0_114 = arith.constant 0 : index
      %400 = vector.load %arg6[%c0_113, %c0_114] : memref<2x32xf32, #tpu.memory_space<vmem>>, vector<2x32xf32>
      tpu.vector_store %arg6[%c0_113, %c0_114], %399 {strides = array<i32>} : memref<2x32xf32, #tpu.memory_space<vmem>>, vector<2x32xf32>,
    } else {
    }
    %c0 = arith.constant 0 : index
    %c0_1 = arith.constant 0 : index
    %3 = vector.load %arg3[%c0, %c0_1] : memref<32x96xbf16, #tpu.memory_space<vmem>>, vector<32x96xbf16>
    %c0_2 = arith.constant 0 : index
    %c0_3 = arith.constant 0 : index
    %4 = vector.load %arg4[%c0_2, %c0_3] : memref<1x32xf32, #tpu.memory_space<vmem>>, vector<1x32xf32>
    %c0_4 = arith.constant 0 : index
    %c0_5 = arith.constant 0 : index
    %5 = vector.load %arg6[%c0_4, %c0_5] : memref<2x32xf32, #tpu.memory_space<vmem>>, vector<2x32xf32>
    %c0_6 = arith.constant 0 : index
    %c0_7 = arith.constant 0 : index
    %c0_8 = arith.constant 0 : index
    %6 = vector.load %arg2[%c0_6, %c0_7, %c0_8] : memref<2x8x96xbf16, #tpu.memory_space<vmem>>, vector<2x1x96xbf16>
    %7 = vector.shape_cast %6 : vector<2x1x96xbf16> to vector<2x96xbf16>
    %8 = arith.extf %7 : vector<2x96xbf16> to vector<2x96xf32>
    %9 = arith.truncf %5 : vector<2x32xf32> to vector<2x32xbf16>
    %cst = arith.constant dense<0.000000e+00> : vector<2x96xf32>
    %10 = tpu.matmul %9, %3, %cst {dimension_numbers = #tpu.dot_dimension_numbers<[1], [0], [0], [1], [0, 0, 1, 1], [], []>} : vector<2x32xbf16>, vector<32x96xbf16>, vector<2x96xf32> -> vector<2x96xf32>
    %11 = vector.extract_strided_slice %8 {offsets = [0, 0], sizes = [2, 32], strides = [1, 1]} : vector<2x96xf32> to vector<2x32xf32>
    %12 = vector.extract_strided_slice %10 {offsets = [0, 0], sizes = [2, 32], strides = [1, 1]} : vector<2x96xf32> to vector<2x32xf32>
    %13 = arith.addf %11, %12 : vector<2x32xf32>
    %14 = arith.negf %13 : vector<2x32xf32>
    %15 = math.exp %14 : vector<2x32xf32>
    %cst_9 = arith.constant 1.000000e+00 : f32
    %16 = vector.broadcast %cst_9 : f32 to vector<2x32xf32>
    %17 = arith.addf %16, %15 : vector<2x32xf32>
    %18 = arith.divf %16, %17 : vector<2x32xf32>
    %19 = vector.extract_strided_slice %8 {offsets = [0, 32], sizes = [2, 32], strides = [1, 1]} : vector<2x96xf32> to vector<2x32xf32>
    %20 = vector.extract_strided_slice %10 {offsets = [0, 32], sizes = [2, 32], strides = [1, 1]} : vector<2x96xf32> to vector<2x32xf32>
    %21 = arith.addf %19, %20 : vector<2x32xf32>
    %22 = arith.negf %21 : vector<2x32xf32>
    %23 = math.exp %22 : vector<2x32xf32>
    %cst_10 = arith.constant 1.000000e+00 : f32
    %24 = vector.broadcast %cst_10 : f32 to vector<2x32xf32>
    %25 = arith.addf %24, %23 : vector<2x32xf32>
    %26 = arith.divf %24, %25 : vector<2x32xf32>
    %27 = vector.extract_strided_slice %8 {offsets = [0, 64], sizes = [2, 32], strides = [1, 1]} : vector<2x96xf32> to vector<2x32xf32>
    %28 = vector.extract_strided_slice %10 {offsets = [0, 64], sizes = [2, 32], strides = [1, 1]} : vector<2x96xf32> to vector<2x32xf32>
    %29 = vector.broadcast %4 : vector<1x32xf32> to vector<2x32xf32>
    %30 = arith.addf %28, %29 : vector<2x32xf32>
    %31 = arith.mulf %18, %30 : vector<2x32xf32>
    %32 = arith.addf %27, %31 : vector<2x32xf32>
    %33 = math.tanh %32 : vector<2x32xf32>
    %cst_11 = arith.constant 1.000000e+00 : f32
    %34 = vector.broadcast %cst_11 : f32 to vector<2x32xf32>
    %35 = arith.subf %34, %26 : vector<2x32xf32>
    %36 = arith.mulf %35, %33 : vector<2x32xf32>
    %37 = arith.mulf %26, %5 : vector<2x32xf32>
    %38 = arith.addf %36, %37 : vector<2x32xf32>
    %cst_12 = arith.constant 5.000000e-01 : f32
    %39 = vector.broadcast %cst_12 : f32 to vector<2x32xf32>
    %40 = arith.mulf %39, %38 : vector<2x32xf32>
    %cst_13 = arith.constant 4.471500e-02 : f32
    %41 = vector.broadcast %cst_13 : f32 to vector<2x32xf32>
    %42 = arith.mulf %41, %38 : vector<2x32xf32>
    %43 = arith.mulf %42, %38 : vector<2x32xf32>
    %44 = arith.mulf %43, %38 : vector<2x32xf32>
    %45 = arith.addf %38, %44 : vector<2x32xf32>
    %cst_14 = arith.constant 0.797884583 : f32
    %46 = vector.broadcast %cst_14 : f32 to vector<2x32xf32>
    %47 = arith.mulf %46, %45 : vector<2x32xf32>
    %48 = math.tanh %47 : vector<2x32xf32>
    %cst_15 = arith.constant 1.000000e+00 : f32
    %49 = vector.broadcast %cst_15 : f32 to vector<2x32xf32>
    %50 = arith.addf %49, %48 : vector<2x32xf32>
    %51 = arith.mulf %40, %50 : vector<2x32xf32>
    %c0_16 = arith.constant 0 : index
    %c0_17 = arith.constant 0 : index
    %c0_18 = arith.constant 0 : index
    %52 = vector.load %arg5[%c0_16, %c0_17, %c0_18] : memref<2x8x32xf32, #tpu.memory_space<vmem>>, vector<2x1x32xf32>
    %53 = vector.shape_cast %52 : vector<2x1x32xf32> to vector<2x32xf32>
    %54 = vector.shape_cast %51 : vector<2x32xf32> to vector<2x1x32xf32>
    tpu.vector_store %arg5[%c0_16, %c0_17, %c0_18], %54 {strides = array<i32>} : memref<2x8x32xf32, #tpu.memory_space<vmem>>, vector<2x1x32xf32>,
    %c0_19 = arith.constant 0 : index
    %c1 = arith.constant 1 : index
    %c0_20 = arith.constant 0 : index
    %55 = vector.load %arg2[%c0_19, %c1, %c0_20] : memref<2x8x96xbf16, #tpu.memory_space<vmem>>, vector<2x1x96xbf16>
    %56 = vector.shape_cast %55 : vector<2x1x96xbf16> to vector<2x96xbf16>
    %57 = arith.extf %56 : vector<2x96xbf16> to vector<2x96xf32>
    %58 = arith.truncf %38 : vector<2x32xf32> to vector<2x32xbf16>
    %cst_21 = arith.constant dense<0.000000e+00> : vector<2x96xf32>
    %59 = tpu.matmul %58, %3, %cst_21 {dimension_numbers = #tpu.dot_dimension_numbers<[1], [0], [0], [1], [0, 0, 1, 1], [], []>} : vector<2x32xbf16>, vector<32x96xbf16>, vector<2x96xf32> -> vector<2x96xf32>
    %60 = vector.extract_strided_slice %57 {offsets = [0, 0], sizes = [2, 32], strides = [1, 1]} : vector<2x96xf32> to vector<2x32xf32>
    %61 = vector.extract_strided_slice %59 {offsets = [0, 0], sizes = [2, 32], strides = [1, 1]} : vector<2x96xf32> to vector<2x32xf32>
    %62 = arith.addf %60, %61 : vector<2x32xf32>
    %63 = arith.negf %62 : vector<2x32xf32>
    %64 = math.exp %63 : vector<2x32xf32>
    %cst_22 = arith.constant 1.000000e+00 : f32
    %65 = vector.broadcast %cst_22 : f32 to vector<2x32xf32>
    %66 = arith.addf %65, %64 : vector<2x32xf32>
    %67 = arith.divf %65, %66 : vector<2x32xf32>
    %68 = vector.extract_strided_slice %57 {offsets = [0, 32], sizes = [2, 32], strides = [1, 1]} : vector<2x96xf32> to vector<2x32xf32>
    %69 = vector.extract_strided_slice %59 {offsets = [0, 32], sizes = [2, 32], strides = [1, 1]} : vector<2x96xf32> to vector<2x32xf32>
    %70 = arith.addf %68, %69 : vector<2x32xf32>
    %71 = arith.negf %70 : vector<2x32xf32>
    %72 = math.exp %71 : vector<2x32xf32>
    %cst_23 = arith.constant 1.000000e+00 : f32
    %73 = vector.broadcast %cst_23 : f32 to vector<2x32xf32>
    %74 = arith.addf %73, %72 : vector<2x32xf32>
    %75 = arith.divf %73, %74 : vector<2x32xf32>
    %76 = vector.extract_strided_slice %57 {offsets = [0, 64], sizes = [2, 32], strides = [1, 1]} : vector<2x96xf32> to vector<2x32xf32>
    %77 = vector.extract_strided_slice %59 {offsets = [0, 64], sizes = [2, 32], strides = [1, 1]} : vector<2x96xf32> to vector<2x32xf32>
    %78 = vector.broadcast %4 : vector<1x32xf32> to vector<2x32xf32>
    %79 = arith.addf %77, %78 : vector<2x32xf32>
    %80 = arith.mulf %67, %79 : vector<2x32xf32>
    %81 = arith.addf %76, %80 : vector<2x32xf32>
    %82 = math.tanh %81 : vector<2x32xf32>
    %cst_24 = arith.constant 1.000000e+00 : f32
    %83 = vector.broadcast %cst_24 : f32 to vector<2x32xf32>
    %84 = arith.subf %83, %75 : vector<2x32xf32>
    %85 = arith.mulf %84, %82 : vector<2x32xf32>
    %86 = arith.mulf %75, %38 : vector<2x32xf32>
    %87 = arith.addf %85, %86 : vector<2x32xf32>
    %cst_25 = arith.constant 5.000000e-01 : f32
    %88 = vector.broadcast %cst_25 : f32 to vector<2x32xf32>
    %89 = arith.mulf %88, %87 : vector<2x32xf32>
    %cst_26 = arith.constant 4.471500e-02 : f32
    %90 = vector.broadcast %cst_26 : f32 to vector<2x32xf32>
    %91 = arith.mulf %90, %87 : vector<2x32xf32>
    %92 = arith.mulf %91, %87 : vector<2x32xf32>
    %93 = arith.mulf %92, %87 : vector<2x32xf32>
    %94 = arith.addf %87, %93 : vector<2x32xf32>
    %cst_27 = arith.constant 0.797884583 : f32
    %95 = vector.broadcast %cst_27 : f32 to vector<2x32xf32>
    %96 = arith.mulf %95, %94 : vector<2x32xf32>
    %97 = math.tanh %96 : vector<2x32xf32>
    %cst_28 = arith.constant 1.000000e+00 : f32
    %98 = vector.broadcast %cst_28 : f32 to vector<2x32xf32>
    %99 = arith.addf %98, %97 : vector<2x32xf32>
    %100 = arith.mulf %89, %99 : vector<2x32xf32>
    %c0_29 = arith.constant 0 : index
    %c1_30 = arith.constant 1 : index
    %c0_31 = arith.constant 0 : index
    %101 = vector.load %arg5[%c0_29, %c1_30, %c0_31] : memref<2x8x32xf32, #tpu.memory_space<vmem>>, vector<2x1x32xf32>
    %102 = vector.shape_cast %101 : vector<2x1x32xf32> to vector<2x32xf32>
    %103 = vector.shape_cast %100 : vector<2x32xf32> to vector<2x1x32xf32>
    tpu.vector_store %arg5[%c0_29, %c1_30, %c0_31], %103 {strides = array<i32>} : memref<2x8x32xf32, #tpu.memory_space<vmem>>, vector<2x1x32xf32>,
    %c0_32 = arith.constant 0 : index
    %c2 = arith.constant 2 : index
    %c0_33 = arith.constant 0 : index
    %104 = vector.load %arg2[%c0_32, %c2, %c0_33] : memref<2x8x96xbf16, #tpu.memory_space<vmem>>, vector<2x1x96xbf16>
    %105 = vector.shape_cast %104 : vector<2x1x96xbf16> to vector<2x96xbf16>
    %106 = arith.extf %105 : vector<2x96xbf16> to vector<2x96xf32>
    %107 = arith.truncf %87 : vector<2x32xf32> to vector<2x32xbf16>
    %cst_34 = arith.constant dense<0.000000e+00> : vector<2x96xf32>
    %108 = tpu.matmul %107, %3, %cst_34 {dimension_numbers = #tpu.dot_dimension_numbers<[1], [0], [0], [1], [0, 0, 1, 1], [], []>} : vector<2x32xbf16>, vector<32x96xbf16>, vector<2x96xf32> -> vector<2x96xf32>
    %109 = vector.extract_strided_slice %106 {offsets = [0, 0], sizes = [2, 32], strides = [1, 1]} : vector<2x96xf32> to vector<2x32xf32>
    %110 = vector.extract_strided_slice %108 {offsets = [0, 0], sizes = [2, 32], strides = [1, 1]} : vector<2x96xf32> to vector<2x32xf32>
    %111 = arith.addf %109, %110 : vector<2x32xf32>
    %112 = arith.negf %111 : vector<2x32xf32>
    %113 = math.exp %112 : vector<2x32xf32>
    %cst_35 = arith.constant 1.000000e+00 : f32
    %114 = vector.broadcast %cst_35 : f32 to vector<2x32xf32>
    %115 = arith.addf %114, %113 : vector<2x32xf32>
    %116 = arith.divf %114, %115 : vector<2x32xf32>
    %117 = vector.extract_strided_slice %106 {offsets = [0, 32], sizes = [2, 32], strides = [1, 1]} : vector<2x96xf32> to vector<2x32xf32>
    %118 = vector.extract_strided_slice %108 {offsets = [0, 32], sizes = [2, 32], strides = [1, 1]} : vector<2x96xf32> to vector<2x32xf32>
    %119 = arith.addf %117, %118 : vector<2x32xf32>
    %120 = arith.negf %119 : vector<2x32xf32>
    %121 = math.exp %120 : vector<2x32xf32>
    %cst_36 = arith.constant 1.000000e+00 : f32
    %122 = vector.broadcast %cst_36 : f32 to vector<2x32xf32>
    %123 = arith.addf %122, %121 : vector<2x32xf32>
    %124 = arith.divf %122, %123 : vector<2x32xf32>
    %125 = vector.extract_strided_slice %106 {offsets = [0, 64], sizes = [2, 32], strides = [1, 1]} : vector<2x96xf32> to vector<2x32xf32>
    %126 = vector.extract_strided_slice %108 {offsets = [0, 64], sizes = [2, 32], strides = [1, 1]} : vector<2x96xf32> to vector<2x32xf32>
    %127 = vector.broadcast %4 : vector<1x32xf32> to vector<2x32xf32>
    %128 = arith.addf %126, %127 : vector<2x32xf32>
    %129 = arith.mulf %116, %128 : vector<2x32xf32>
    %130 = arith.addf %125, %129 : vector<2x32xf32>
    %131 = math.tanh %130 : vector<2x32xf32>
    %cst_37 = arith.constant 1.000000e+00 : f32
    %132 = vector.broadcast %cst_37 : f32 to vector<2x32xf32>
    %133 = arith.subf %132, %124 : vector<2x32xf32>
    %134 = arith.mulf %133, %131 : vector<2x32xf32>
    %135 = arith.mulf %124, %87 : vector<2x32xf32>
    %136 = arith.addf %134, %135 : vector<2x32xf32>
    %cst_38 = arith.constant 5.000000e-01 : f32
    %137 = vector.broadcast %cst_38 : f32 to vector<2x32xf32>
    %138 = arith.mulf %137, %136 : vector<2x32xf32>
    %cst_39 = arith.constant 4.471500e-02 : f32
    %139 = vector.broadcast %cst_39 : f32 to vector<2x32xf32>
    %140 = arith.mulf %139, %136 : vector<2x32xf32>
    %141 = arith.mulf %140, %136 : vector<2x32xf32>
    %142 = arith.mulf %141, %136 : vector<2x32xf32>
    %143 = arith.addf %136, %142 : vector<2x32xf32>
    %cst_40 = arith.constant 0.797884583 : f32
    %144 = vector.broadcast %cst_40 : f32 to vector<2x32xf32>
    %145 = arith.mulf %144, %143 : vector<2x32xf32>
    %146 = math.tanh %145 : vector<2x32xf32>
    %cst_41 = arith.constant 1.000000e+00 : f32
    %147 = vector.broadcast %cst_41 : f32 to vector<2x32xf32>
    %148 = arith.addf %147, %146 : vector<2x32xf32>
    %149 = arith.mulf %138, %148 : vector<2x32xf32>
    %c0_42 = arith.constant 0 : index
    %c2_43 = arith.constant 2 : index
    %c0_44 = arith.constant 0 : index
    %150 = vector.load %arg5[%c0_42, %c2_43, %c0_44] : memref<2x8x32xf32, #tpu.memory_space<vmem>>, vector<2x1x32xf32>
    %151 = vector.shape_cast %150 : vector<2x1x32xf32> to vector<2x32xf32>
    %152 = vector.shape_cast %149 : vector<2x32xf32> to vector<2x1x32xf32>
    tpu.vector_store %arg5[%c0_42, %c2_43, %c0_44], %152 {strides = array<i32>} : memref<2x8x32xf32, #tpu.memory_space<vmem>>, vector<2x1x32xf32>,
    %c0_45 = arith.constant 0 : index
    %c3 = arith.constant 3 : index
    %c0_46 = arith.constant 0 : index
    %153 = vector.load %arg2[%c0_45, %c3, %c0_46] : memref<2x8x96xbf16, #tpu.memory_space<vmem>>, vector<2x1x96xbf16>
    %154 = vector.shape_cast %153 : vector<2x1x96xbf16> to vector<2x96xbf16>
    %155 = arith.extf %154 : vector<2x96xbf16> to vector<2x96xf32>
    %156 = arith.truncf %136 : vector<2x32xf32> to vector<2x32xbf16>
    %cst_47 = arith.constant dense<0.000000e+00> : vector<2x96xf32>
    %157 = tpu.matmul %156, %3, %cst_47 {dimension_numbers = #tpu.dot_dimension_numbers<[1], [0], [0], [1], [0, 0, 1, 1], [], []>} : vector<2x32xbf16>, vector<32x96xbf16>, vector<2x96xf32> -> vector<2x96xf32>
    %158 = vector.extract_strided_slice %155 {offsets = [0, 0], sizes = [2, 32], strides = [1, 1]} : vector<2x96xf32> to vector<2x32xf32>
    %159 = vector.extract_strided_slice %157 {offsets = [0, 0], sizes = [2, 32], strides = [1, 1]} : vector<2x96xf32> to vector<2x32xf32>
    %160 = arith.addf %158, %159 : vector<2x32xf32>
    %161 = arith.negf %160 : vector<2x32xf32>
    %162 = math.exp %161 : vector<2x32xf32>
    %cst_48 = arith.constant 1.000000e+00 : f32
    %163 = vector.broadcast %cst_48 : f32 to vector<2x32xf32>
    %164 = arith.addf %163, %162 : vector<2x32xf32>
    %165 = arith.divf %163, %164 : vector<2x32xf32>
    %166 = vector.extract_strided_slice %155 {offsets = [0, 32], sizes = [2, 32], strides = [1, 1]} : vector<2x96xf32> to vector<2x32xf32>
    %167 = vector.extract_strided_slice %157 {offsets = [0, 32], sizes = [2, 32], strides = [1, 1]} : vector<2x96xf32> to vector<2x32xf32>
    %168 = arith.addf %166, %167 : vector<2x32xf32>
    %169 = arith.negf %168 : vector<2x32xf32>
    %170 = math.exp %169 : vector<2x32xf32>
    %cst_49 = arith.constant 1.000000e+00 : f32
    %171 = vector.broadcast %cst_49 : f32 to vector<2x32xf32>
    %172 = arith.addf %171, %170 : vector<2x32xf32>
    %173 = arith.divf %171, %172 : vector<2x32xf32>
    %174 = vector.extract_strided_slice %155 {offsets = [0, 64], sizes = [2, 32], strides = [1, 1]} : vector<2x96xf32> to vector<2x32xf32>
    %175 = vector.extract_strided_slice %157 {offsets = [0, 64], sizes = [2, 32], strides = [1, 1]} : vector<2x96xf32> to vector<2x32xf32>
    %176 = vector.broadcast %4 : vector<1x32xf32> to vector<2x32xf32>
    %177 = arith.addf %175, %176 : vector<2x32xf32>
    %178 = arith.mulf %165, %177 : vector<2x32xf32>
    %179 = arith.addf %174, %178 : vector<2x32xf32>
    %180 = math.tanh %179 : vector<2x32xf32>
    %cst_50 = arith.constant 1.000000e+00 : f32
    %181 = vector.broadcast %cst_50 : f32 to vector<2x32xf32>
    %182 = arith.subf %181, %173 : vector<2x32xf32>
    %183 = arith.mulf %182, %180 : vector<2x32xf32>
    %184 = arith.mulf %173, %136 : vector<2x32xf32>
    %185 = arith.addf %183, %184 : vector<2x32xf32>
    %cst_51 = arith.constant 5.000000e-01 : f32
    %186 = vector.broadcast %cst_51 : f32 to vector<2x32xf32>
    %187 = arith.mulf %186, %185 : vector<2x32xf32>
    %cst_52 = arith.constant 4.471500e-02 : f32
    %188 = vector.broadcast %cst_52 : f32 to vector<2x32xf32>
    %189 = arith.mulf %188, %185 : vector<2x32xf32>
    %190 = arith.mulf %189, %185 : vector<2x32xf32>
    %191 = arith.mulf %190, %185 : vector<2x32xf32>
    %192 = arith.addf %185, %191 : vector<2x32xf32>
    %cst_53 = arith.constant 0.797884583 : f32
    %193 = vector.broadcast %cst_53 : f32 to vector<2x32xf32>
    %194 = arith.mulf %193, %192 : vector<2x32xf32>
    %195 = math.tanh %194 : vector<2x32xf32>
    %cst_54 = arith.constant 1.000000e+00 : f32
    %196 = vector.broadcast %cst_54 : f32 to vector<2x32xf32>
    %197 = arith.addf %196, %195 : vector<2x32xf32>
    %198 = arith.mulf %187, %197 : vector<2x32xf32>
    %c0_55 = arith.constant 0 : index
    %c3_56 = arith.constant 3 : index
    %c0_57 = arith.constant 0 : index
    %199 = vector.load %arg5[%c0_55, %c3_56, %c0_57] : memref<2x8x32xf32, #tpu.memory_space<vmem>>, vector<2x1x32xf32>
    %200 = vector.shape_cast %199 : vector<2x1x32xf32> to vector<2x32xf32>
    %201 = vector.shape_cast %198 : vector<2x32xf32> to vector<2x1x32xf32>
    tpu.vector_store %arg5[%c0_55, %c3_56, %c0_57], %201 {strides = array<i32>} : memref<2x8x32xf32, #tpu.memory_space<vmem>>, vector<2x1x32xf32>,
    %c0_58 = arith.constant 0 : index
    %c4 = arith.constant 4 : index
    %c0_59 = arith.constant 0 : index
    %202 = vector.load %arg2[%c0_58, %c4, %c0_59] : memref<2x8x96xbf16, #tpu.memory_space<vmem>>, vector<2x1x96xbf16>
    %203 = vector.shape_cast %202 : vector<2x1x96xbf16> to vector<2x96xbf16>
    %204 = arith.extf %203 : vector<2x96xbf16> to vector<2x96xf32>
    %205 = arith.truncf %185 : vector<2x32xf32> to vector<2x32xbf16>
    %cst_60 = arith.constant dense<0.000000e+00> : vector<2x96xf32>
    %206 = tpu.matmul %205, %3, %cst_60 {dimension_numbers = #tpu.dot_dimension_numbers<[1], [0], [0], [1], [0, 0, 1, 1], [], []>} : vector<2x32xbf16>, vector<32x96xbf16>, vector<2x96xf32> -> vector<2x96xf32>
    %207 = vector.extract_strided_slice %204 {offsets = [0, 0], sizes = [2, 32], strides = [1, 1]} : vector<2x96xf32> to vector<2x32xf32>
    %208 = vector.extract_strided_slice %206 {offsets = [0, 0], sizes = [2, 32], strides = [1, 1]} : vector<2x96xf32> to vector<2x32xf32>
    %209 = arith.addf %207, %208 : vector<2x32xf32>
    %210 = arith.negf %209 : vector<2x32xf32>
    %211 = math.exp %210 : vector<2x32xf32>
    %cst_61 = arith.constant 1.000000e+00 : f32
    %212 = vector.broadcast %cst_61 : f32 to vector<2x32xf32>
    %213 = arith.addf %212, %211 : vector<2x32xf32>
    %214 = arith.divf %212, %213 : vector<2x32xf32>
    %215 = vector.extract_strided_slice %204 {offsets = [0, 32], sizes = [2, 32], strides = [1, 1]} : vector<2x96xf32> to vector<2x32xf32>
    %216 = vector.extract_strided_slice %206 {offsets = [0, 32], sizes = [2, 32], strides = [1, 1]} : vector<2x96xf32> to vector<2x32xf32>
    %217 = arith.addf %215, %216 : vector<2x32xf32>
    %218 = arith.negf %217 : vector<2x32xf32>
    %219 = math.exp %218 : vector<2x32xf32>
    %cst_62 = arith.constant 1.000000e+00 : f32
    %220 = vector.broadcast %cst_62 : f32 to vector<2x32xf32>
    %221 = arith.addf %220, %219 : vector<2x32xf32>
    %222 = arith.divf %220, %221 : vector<2x32xf32>
    %223 = vector.extract_strided_slice %204 {offsets = [0, 64], sizes = [2, 32], strides = [1, 1]} : vector<2x96xf32> to vector<2x32xf32>
    %224 = vector.extract_strided_slice %206 {offsets = [0, 64], sizes = [2, 32], strides = [1, 1]} : vector<2x96xf32> to vector<2x32xf32>
    %225 = vector.broadcast %4 : vector<1x32xf32> to vector<2x32xf32>
    %226 = arith.addf %224, %225 : vector<2x32xf32>
    %227 = arith.mulf %214, %226 : vector<2x32xf32>
    %228 = arith.addf %223, %227 : vector<2x32xf32>
    %229 = math.tanh %228 : vector<2x32xf32>
    %cst_63 = arith.constant 1.000000e+00 : f32
    %230 = vector.broadcast %cst_63 : f32 to vector<2x32xf32>
    %231 = arith.subf %230, %222 : vector<2x32xf32>
    %232 = arith.mulf %231, %229 : vector<2x32xf32>
    %233 = arith.mulf %222, %185 : vector<2x32xf32>
    %234 = arith.addf %232, %233 : vector<2x32xf32>
    %cst_64 = arith.constant 5.000000e-01 : f32
    %235 = vector.broadcast %cst_64 : f32 to vector<2x32xf32>
    %236 = arith.mulf %235, %234 : vector<2x32xf32>
    %cst_65 = arith.constant 4.471500e-02 : f32
    %237 = vector.broadcast %cst_65 : f32 to vector<2x32xf32>
    %238 = arith.mulf %237, %234 : vector<2x32xf32>
    %239 = arith.mulf %238, %234 : vector<2x32xf32>
    %240 = arith.mulf %239, %234 : vector<2x32xf32>
    %241 = arith.addf %234, %240 : vector<2x32xf32>
    %cst_66 = arith.constant 0.797884583 : f32
    %242 = vector.broadcast %cst_66 : f32 to vector<2x32xf32>
    %243 = arith.mulf %242, %241 : vector<2x32xf32>
    %244 = math.tanh %243 : vector<2x32xf32>
    %cst_67 = arith.constant 1.000000e+00 : f32
    %245 = vector.broadcast %cst_67 : f32 to vector<2x32xf32>
    %246 = arith.addf %245, %244 : vector<2x32xf32>
    %247 = arith.mulf %236, %246 : vector<2x32xf32>
    %c0_68 = arith.constant 0 : index
    %c4_69 = arith.constant 4 : index
    %c0_70 = arith.constant 0 : index
    %248 = vector.load %arg5[%c0_68, %c4_69, %c0_70] : memref<2x8x32xf32, #tpu.memory_space<vmem>>, vector<2x1x32xf32>
    %249 = vector.shape_cast %248 : vector<2x1x32xf32> to vector<2x32xf32>
    %250 = vector.shape_cast %247 : vector<2x32xf32> to vector<2x1x32xf32>
    tpu.vector_store %arg5[%c0_68, %c4_69, %c0_70], %250 {strides = array<i32>} : memref<2x8x32xf32, #tpu.memory_space<vmem>>, vector<2x1x32xf32>,
    %c0_71 = arith.constant 0 : index
    %c5 = arith.constant 5 : index
    %c0_72 = arith.constant 0 : index
    %251 = vector.load %arg2[%c0_71, %c5, %c0_72] : memref<2x8x96xbf16, #tpu.memory_space<vmem>>, vector<2x1x96xbf16>
    %252 = vector.shape_cast %251 : vector<2x1x96xbf16> to vector<2x96xbf16>
    %253 = arith.extf %252 : vector<2x96xbf16> to vector<2x96xf32>
    %254 = arith.truncf %234 : vector<2x32xf32> to vector<2x32xbf16>
    %cst_73 = arith.constant dense<0.000000e+00> : vector<2x96xf32>
    %255 = tpu.matmul %254, %3, %cst_73 {dimension_numbers = #tpu.dot_dimension_numbers<[1], [0], [0], [1], [0, 0, 1, 1], [], []>} : vector<2x32xbf16>, vector<32x96xbf16>, vector<2x96xf32> -> vector<2x96xf32>
    %256 = vector.extract_strided_slice %253 {offsets = [0, 0], sizes = [2, 32], strides = [1, 1]} : vector<2x96xf32> to vector<2x32xf32>
    %257 = vector.extract_strided_slice %255 {offsets = [0, 0], sizes = [2, 32], strides = [1, 1]} : vector<2x96xf32> to vector<2x32xf32>
    %258 = arith.addf %256, %257 : vector<2x32xf32>
    %259 = arith.negf %258 : vector<2x32xf32>
    %260 = math.exp %259 : vector<2x32xf32>
    %cst_74 = arith.constant 1.000000e+00 : f32
    %261 = vector.broadcast %cst_74 : f32 to vector<2x32xf32>
    %262 = arith.addf %261, %260 : vector<2x32xf32>
    %263 = arith.divf %261, %262 : vector<2x32xf32>
    %264 = vector.extract_strided_slice %253 {offsets = [0, 32], sizes = [2, 32], strides = [1, 1]} : vector<2x96xf32> to vector<2x32xf32>
    %265 = vector.extract_strided_slice %255 {offsets = [0, 32], sizes = [2, 32], strides = [1, 1]} : vector<2x96xf32> to vector<2x32xf32>
    %266 = arith.addf %264, %265 : vector<2x32xf32>
    %267 = arith.negf %266 : vector<2x32xf32>
    %268 = math.exp %267 : vector<2x32xf32>
    %cst_75 = arith.constant 1.000000e+00 : f32
    %269 = vector.broadcast %cst_75 : f32 to vector<2x32xf32>
    %270 = arith.addf %269, %268 : vector<2x32xf32>
    %271 = arith.divf %269, %270 : vector<2x32xf32>
    %272 = vector.extract_strided_slice %253 {offsets = [0, 64], sizes = [2, 32], strides = [1, 1]} : vector<2x96xf32> to vector<2x32xf32>
    %273 = vector.extract_strided_slice %255 {offsets = [0, 64], sizes = [2, 32], strides = [1, 1]} : vector<2x96xf32> to vector<2x32xf32>
    %274 = vector.broadcast %4 : vector<1x32xf32> to vector<2x32xf32>
    %275 = arith.addf %273, %274 : vector<2x32xf32>
    %276 = arith.mulf %263, %275 : vector<2x32xf32>
    %277 = arith.addf %272, %276 : vector<2x32xf32>
    %278 = math.tanh %277 : vector<2x32xf32>
    %cst_76 = arith.constant 1.000000e+00 : f32
    %279 = vector.broadcast %cst_76 : f32 to vector<2x32xf32>
    %280 = arith.subf %279, %271 : vector<2x32xf32>
    %281 = arith.mulf %280, %278 : vector<2x32xf32>
    %282 = arith.mulf %271, %234 : vector<2x32xf32>
    %283 = arith.addf %281, %282 : vector<2x32xf32>
    %cst_77 = arith.constant 5.000000e-01 : f32
    %284 = vector.broadcast %cst_77 : f32 to vector<2x32xf32>
    %285 = arith.mulf %284, %283 : vector<2x32xf32>
    %cst_78 = arith.constant 4.471500e-02 : f32
    %286 = vector.broadcast %cst_78 : f32 to vector<2x32xf32>
    %287 = arith.mulf %286, %283 : vector<2x32xf32>
    %288 = arith.mulf %287, %283 : vector<2x32xf32>
    %289 = arith.mulf %288, %283 : vector<2x32xf32>
    %290 = arith.addf %283, %289 : vector<2x32xf32>
    %cst_79 = arith.constant 0.797884583 : f32
    %291 = vector.broadcast %cst_79 : f32 to vector<2x32xf32>
    %292 = arith.mulf %291, %290 : vector<2x32xf32>
    %293 = math.tanh %292 : vector<2x32xf32>
    %cst_80 = arith.constant 1.000000e+00 : f32
    %294 = vector.broadcast %cst_80 : f32 to vector<2x32xf32>
    %295 = arith.addf %294, %293 : vector<2x32xf32>
    %296 = arith.mulf %285, %295 : vector<2x32xf32>
    %c0_81 = arith.constant 0 : index
    %c5_82 = arith.constant 5 : index
    %c0_83 = arith.constant 0 : index
    %297 = vector.load %arg5[%c0_81, %c5_82, %c0_83] : memref<2x8x32xf32, #tpu.memory_space<vmem>>, vector<2x1x32xf32>
    %298 = vector.shape_cast %297 : vector<2x1x32xf32> to vector<2x32xf32>
    %299 = vector.shape_cast %296 : vector<2x32xf32> to vector<2x1x32xf32>
    tpu.vector_store %arg5[%c0_81, %c5_82, %c0_83], %299 {strides = array<i32>} : memref<2x8x32xf32, #tpu.memory_space<vmem>>, vector<2x1x32xf32>,
    %c0_84 = arith.constant 0 : index
    %c6 = arith.constant 6 : index
    %c0_85 = arith.constant 0 : index
    %300 = vector.load %arg2[%c0_84, %c6, %c0_85] : memref<2x8x96xbf16, #tpu.memory_space<vmem>>, vector<2x1x96xbf16>
    %301 = vector.shape_cast %300 : vector<2x1x96xbf16> to vector<2x96xbf16>
    %302 = arith.extf %301 : vector<2x96xbf16> to vector<2x96xf32>
    %303 = arith.truncf %283 : vector<2x32xf32> to vector<2x32xbf16>
    %cst_86 = arith.constant dense<0.000000e+00> : vector<2x96xf32>
    %304 = tpu.matmul %303, %3, %cst_86 {dimension_numbers = #tpu.dot_dimension_numbers<[1], [0], [0], [1], [0, 0, 1, 1], [], []>} : vector<2x32xbf16>, vector<32x96xbf16>, vector<2x96xf32> -> vector<2x96xf32>
    %305 = vector.extract_strided_slice %302 {offsets = [0, 0], sizes = [2, 32], strides = [1, 1]} : vector<2x96xf32> to vector<2x32xf32>
    %306 = vector.extract_strided_slice %304 {offsets = [0, 0], sizes = [2, 32], strides = [1, 1]} : vector<2x96xf32> to vector<2x32xf32>
    %307 = arith.addf %305, %306 : vector<2x32xf32>
    %308 = arith.negf %307 : vector<2x32xf32>
    %309 = math.exp %308 : vector<2x32xf32>
    %cst_87 = arith.constant 1.000000e+00 : f32
    %310 = vector.broadcast %cst_87 : f32 to vector<2x32xf32>
    %311 = arith.addf %310, %309 : vector<2x32xf32>
    %312 = arith.divf %310, %311 : vector<2x32xf32>
    %313 = vector.extract_strided_slice %302 {offsets = [0, 32], sizes = [2, 32], strides = [1, 1]} : vector<2x96xf32> to vector<2x32xf32>
    %314 = vector.extract_strided_slice %304 {offsets = [0, 32], sizes = [2, 32], strides = [1, 1]} : vector<2x96xf32> to vector<2x32xf32>
    %315 = arith.addf %313, %314 : vector<2x32xf32>
    %316 = arith.negf %315 : vector<2x32xf32>
    %317 = math.exp %316 : vector<2x32xf32>
    %cst_88 = arith.constant 1.000000e+00 : f32
    %318 = vector.broadcast %cst_88 : f32 to vector<2x32xf32>
    %319 = arith.addf %318, %317 : vector<2x32xf32>
    %320 = arith.divf %318, %319 : vector<2x32xf32>
    %321 = vector.extract_strided_slice %302 {offsets = [0, 64], sizes = [2, 32], strides = [1, 1]} : vector<2x96xf32> to vector<2x32xf32>
    %322 = vector.extract_strided_slice %304 {offsets = [0, 64], sizes = [2, 32], strides = [1, 1]} : vector<2x96xf32> to vector<2x32xf32>
    %323 = vector.broadcast %4 : vector<1x32xf32> to vector<2x32xf32>
    %324 = arith.addf %322, %323 : vector<2x32xf32>
    %325 = arith.mulf %312, %324 : vector<2x32xf32>
    %326 = arith.addf %321, %325 : vector<2x32xf32>
    %327 = math.tanh %326 : vector<2x32xf32>
    %cst_89 = arith.constant 1.000000e+00 : f32
    %328 = vector.broadcast %cst_89 : f32 to vector<2x32xf32>
    %329 = arith.subf %328, %320 : vector<2x32xf32>
    %330 = arith.mulf %329, %327 : vector<2x32xf32>
    %331 = arith.mulf %320, %283 : vector<2x32xf32>
    %332 = arith.addf %330, %331 : vector<2x32xf32>
    %cst_90 = arith.constant 5.000000e-01 : f32
    %333 = vector.broadcast %cst_90 : f32 to vector<2x32xf32>
    %334 = arith.mulf %333, %332 : vector<2x32xf32>
    %cst_91 = arith.constant 4.471500e-02 : f32
    %335 = vector.broadcast %cst_91 : f32 to vector<2x32xf32>
    %336 = arith.mulf %335, %332 : vector<2x32xf32>
    %337 = arith.mulf %336, %332 : vector<2x32xf32>
    %338 = arith.mulf %337, %332 : vector<2x32xf32>
    %339 = arith.addf %332, %338 : vector<2x32xf32>
    %cst_92 = arith.constant 0.797884583 : f32
    %340 = vector.broadcast %cst_92 : f32 to vector<2x32xf32>
    %341 = arith.mulf %340, %339 : vector<2x32xf32>
    %342 = math.tanh %341 : vector<2x32xf32>
    %cst_93 = arith.constant 1.000000e+00 : f32
    %343 = vector.broadcast %cst_93 : f32 to vector<2x32xf32>
    %344 = arith.addf %343, %342 : vector<2x32xf32>
    %345 = arith.mulf %334, %344 : vector<2x32xf32>
    %c0_94 = arith.constant 0 : index
    %c6_95 = arith.constant 6 : index
    %c0_96 = arith.constant 0 : index
    %346 = vector.load %arg5[%c0_94, %c6_95, %c0_96] : memref<2x8x32xf32, #tpu.memory_space<vmem>>, vector<2x1x32xf32>
    %347 = vector.shape_cast %346 : vector<2x1x32xf32> to vector<2x32xf32>
    %348 = vector.shape_cast %345 : vector<2x32xf32> to vector<2x1x32xf32>
    tpu.vector_store %arg5[%c0_94, %c6_95, %c0_96], %348 {strides = array<i32>} : memref<2x8x32xf32, #tpu.memory_space<vmem>>, vector<2x1x32xf32>,
    %c0_97 = arith.constant 0 : index
    %c7 = arith.constant 7 : index
    %c0_98 = arith.constant 0 : index
    %349 = vector.load %arg2[%c0_97, %c7, %c0_98] : memref<2x8x96xbf16, #tpu.memory_space<vmem>>, vector<2x1x96xbf16>
    %350 = vector.shape_cast %349 : vector<2x1x96xbf16> to vector<2x96xbf16>
    %351 = arith.extf %350 : vector<2x96xbf16> to vector<2x96xf32>
    %352 = arith.truncf %332 : vector<2x32xf32> to vector<2x32xbf16>
    %cst_99 = arith.constant dense<0.000000e+00> : vector<2x96xf32>
    %353 = tpu.matmul %352, %3, %cst_99 {dimension_numbers = #tpu.dot_dimension_numbers<[1], [0], [0], [1], [0, 0, 1, 1], [], []>} : vector<2x32xbf16>, vector<32x96xbf16>, vector<2x96xf32> -> vector<2x96xf32>
    %354 = vector.extract_strided_slice %351 {offsets = [0, 0], sizes = [2, 32], strides = [1, 1]} : vector<2x96xf32> to vector<2x32xf32>
    %355 = vector.extract_strided_slice %353 {offsets = [0, 0], sizes = [2, 32], strides = [1, 1]} : vector<2x96xf32> to vector<2x32xf32>
    %356 = arith.addf %354, %355 : vector<2x32xf32>
    %357 = arith.negf %356 : vector<2x32xf32>
    %358 = math.exp %357 : vector<2x32xf32>
    %cst_100 = arith.constant 1.000000e+00 : f32
    %359 = vector.broadcast %cst_100 : f32 to vector<2x32xf32>
    %360 = arith.addf %359, %358 : vector<2x32xf32>
    %361 = arith.divf %359, %360 : vector<2x32xf32>
    %362 = vector.extract_strided_slice %351 {offsets = [0, 32], sizes = [2, 32], strides = [1, 1]} : vector<2x96xf32> to vector<2x32xf32>
    %363 = vector.extract_strided_slice %353 {offsets = [0, 32], sizes = [2, 32], strides = [1, 1]} : vector<2x96xf32> to vector<2x32xf32>
    %364 = arith.addf %362, %363 : vector<2x32xf32>
    %365 = arith.negf %364 : vector<2x32xf32>
    %366 = math.exp %365 : vector<2x32xf32>
    %cst_101 = arith.constant 1.000000e+00 : f32
    %367 = vector.broadcast %cst_101 : f32 to vector<2x32xf32>
    %368 = arith.addf %367, %366 : vector<2x32xf32>
    %369 = arith.divf %367, %368 : vector<2x32xf32>
    %370 = vector.extract_strided_slice %351 {offsets = [0, 64], sizes = [2, 32], strides = [1, 1]} : vector<2x96xf32> to vector<2x32xf32>
    %371 = vector.extract_strided_slice %353 {offsets = [0, 64], sizes = [2, 32], strides = [1, 1]} : vector<2x96xf32> to vector<2x32xf32>
    %372 = vector.broadcast %4 : vector<1x32xf32> to vector<2x32xf32>
    %373 = arith.addf %371, %372 : vector<2x32xf32>
    %374 = arith.mulf %361, %373 : vector<2x32xf32>
    %375 = arith.addf %370, %374 : vector<2x32xf32>
    %376 = math.tanh %375 : vector<2x32xf32>
    %cst_102 = arith.constant 1.000000e+00 : f32
    %377 = vector.broadcast %cst_102 : f32 to vector<2x32xf32>
    %378 = arith.subf %377, %369 : vector<2x32xf32>
    %379 = arith.mulf %378, %376 : vector<2x32xf32>
    %380 = arith.mulf %369, %332 : vector<2x32xf32>
    %381 = arith.addf %379, %380 : vector<2x32xf32>
    %cst_103 = arith.constant 5.000000e-01 : f32
    %382 = vector.broadcast %cst_103 : f32 to vector<2x32xf32>
    %383 = arith.mulf %382, %381 : vector<2x32xf32>
    %cst_104 = arith.constant 4.471500e-02 : f32
    %384 = vector.broadcast %cst_104 : f32 to vector<2x32xf32>
    %385 = arith.mulf %384, %381 : vector<2x32xf32>
    %386 = arith.mulf %385, %381 : vector<2x32xf32>
    %387 = arith.mulf %386, %381 : vector<2x32xf32>
    %388 = arith.addf %381, %387 : vector<2x32xf32>
    %cst_105 = arith.constant 0.797884583 : f32
    %389 = vector.broadcast %cst_105 : f32 to vector<2x32xf32>
    %390 = arith.mulf %389, %388 : vector<2x32xf32>
    %391 = math.tanh %390 : vector<2x32xf32>
    %cst_106 = arith.constant 1.000000e+00 : f32
    %392 = vector.broadcast %cst_106 : f32 to vector<2x32xf32>
    %393 = arith.addf %392, %391 : vector<2x32xf32>
    %394 = arith.mulf %383, %393 : vector<2x32xf32>
    %c0_107 = arith.constant 0 : index
    %c7_108 = arith.constant 7 : index
    %c0_109 = arith.constant 0 : index
    %395 = vector.load %arg5[%c0_107, %c7_108, %c0_109] : memref<2x8x32xf32, #tpu.memory_space<vmem>>, vector<2x1x32xf32>
    %396 = vector.shape_cast %395 : vector<2x1x32xf32> to vector<2x32xf32>
    %397 = vector.shape_cast %394 : vector<2x32xf32> to vector<2x1x32xf32>
    tpu.vector_store %arg5[%c0_107, %c7_108, %c0_109], %397 {strides = array<i32>} : memref<2x8x32xf32, #tpu.memory_space<vmem>>, vector<2x1x32xf32>,
    %c0_110 = arith.constant 0 : index
    %c0_111 = arith.constant 0 : index
    %398 = vector.load %arg6[%c0_110, %c0_111] : memref<2x32xf32, #tpu.memory_space<vmem>>, vector<2x32xf32>
    tpu.vector_store %arg6[%c0_110, %c0_111], %381 {strides = array<i32>} : memref<2x32xf32, #tpu.memory_space<vmem>>, vector<2x32xf32>,
    return
  }
  func.func @transform_0(%arg0: i32, %arg1: i32) -> (i32, i32, i32) {
    %c0_i32 = arith.constant 0 : i32
    %c0_i32_0 = arith.constant 0 : i32
    return %arg0, %arg1, %c0_i32 : i32, i32, i32
  }
  func.func @transform_1(%arg0: i32, %arg1: i32) -> (i32, i32) {
    %c0_i32 = arith.constant 0 : i32
    %c0_i32_0 = arith.constant 0 : i32
    %c0_i32_1 = arith.constant 0 : i32
    return %c0_i32, %c0_i32_0 : i32, i32
  }
  func.func @transform_2(%arg0: i32, %arg1: i32) -> (i32, i32) {
    %c0_i32 = arith.constant 0 : i32
    %c0_i32_0 = arith.constant 0 : i32
    %c0_i32_1 = arith.constant 0 : i32
    return %c0_i32, %c0_i32_0 : i32, i32
  }
  func.func @transform_3(%arg0: i32, %arg1: i32) -> (i32, i32, i32) {
    %c0_i32 = arith.constant 0 : i32
    %c0_i32_0 = arith.constant 0 : i32
    return %arg0, %arg1, %c0_i32 : i32, i32, i32
  }
}

</mosaic_0001>

<llo_original>
// kernel: tpu_custom_call.1
$region0: #{tpu_custom_call.1}
  #allocation0 [shape = 'u32[]', space=smem, size = 0x4, offset = 0x4, fixed_abs, tag = 'smem constant byte address 0x4 - core index']
  #allocation1 [shape = 'u32[72,128]{1,0:T(1,128)}', space=vmem, size = 0x9000, scoped, tag = 'internal scratch']
  #allocation2 [shape = 'f32[2,32]{1,0:T(2,128)}', space=vmem, size = 0x400, scoped, tag = 'scratch operand']
  %s0 = inlined_call_operand.hbm [shape: bf16[2,8,96], index: 0, kind: input, shape index: {}]
  %s1 = inlined_call_operand.hbm [shape: bf16[32,96], index: 1, kind: input, shape index: {}]
  %s2 = inlined_call_operand.vmem [shape: f32[1,32], index: 2, kind: input, shape index: {}]
  %s3 = inlined_call_operand.hbm [shape: f32[2,8,32], index: 3, kind: output, shape index: {}]
  %s4 = sld [smem:[#allocation0]]
  $region34: #{tpu_custom_call.1} parent=0
    _
  %s6 = ssub.s32 1, %s4
  %s7 = scalar_select 0, %s6, %s4
  $region1: #{tpu_custom_call.1} parent=0
    #allocation3 [shape = 'u8[4096]{0}', space=vmem, size = 0x1000, scoped, tag = 'input window, operand 0, single buffered']
    #allocation4 [shape = 's32[1]{0}', space=sflag, size = 0x4, scoped, tag = 'scoped memory for tpu_custom_call.1']
    #allocation5 [shape = 's32[1]{0}', space=sflag, size = 0x4, scoped, tag = 'scoped memory for tpu_custom_call.1']
    #allocation6 [shape = 'u8[8192]{0}', space=vmem, size = 0x2000, scoped, tag = 'input window, operand 1, single buffered']
    #allocation7 [shape = 's32[1]{0}', space=sflag, size = 0x4, scoped, tag = 'scoped memory for tpu_custom_call.1']
    #allocation8 [shape = 'u8[8192]{0}', space=vmem, size = 0x2000, scoped, tag = 'output window, operand 0, single buffered']
    %8 = vsyncpa [#allocation4], 0
    %9 = vsyncpa [#allocation7], 0
    %10 = vsyncpa [#allocation5], 0
    // Predicated region
    $region2: #{tpu_custom_call.1} parent=1 // pred_check
      _
    $region3: #{tpu_custom_call.1} parent=1 // pred_check_branch
      %12 = sbr.rel (0) target = $region5
    $region4: #{tpu_custom_call.1} parent=1 // pred_region
      %14 = vsyncadd [#allocation4], 0
      %s15 = sshll.u32 %s0, 4
      %s16 = int_to_ptr.hbm [resolvable:$true] %s15
      %s17 = sshll.u32 [#allocation3], 4
      %s18 = int_to_ptr.vmem [resolvable:$true] %s17
      %23 = dma.hbm_to_vmem [thread:$0]  %s16, 128, %s18, [#allocation4], 64, 64, 4
    $region5: #{tpu_custom_call.1} parent=1 // pred_fallthru
      _
    // Predicated region
    $region6: #{tpu_custom_call.1} parent=1 // pred_check
      _
    $region7: #{tpu_custom_call.1} parent=1 // pred_check_branch
      %25 = sbr.rel (0) target = $region9
    $region8: #{tpu_custom_call.1} parent=1 // pred_region
      %27 = vsyncadd [#allocation7], 0
      %s28 = sshll.u32 %s1, 4
      %s29 = int_to_ptr.hbm [resolvable:$true] %s28
      %s30 = sshll.u32 [#allocation6], 4
      %s31 = int_to_ptr.vmem [resolvable:$true] %s30
      %36 = dma.hbm_to_vmem [thread:$0]  %s29, 256, %s31, [#allocation7], 64, 64, 4
    $region9: #{tpu_custom_call.1} parent=1 // pred_fallthru
      _
    // Predicated region
    $region10: #{tpu_custom_call.1} parent=1 // pred_check
      _
    $region11: #{tpu_custom_call.1} parent=1 // pred_check_branch
      %38 = sbr.rel (0) target = $region13
    $region12: #{tpu_custom_call.1} parent=1 // pred_region
      _
    $region13: #{tpu_custom_call.1} parent=1 // pred_fallthru
      _
    // Predicated region
    $region14: #{tpu_custom_call.1} parent=1 // pred_check
      _
    $region15: #{tpu_custom_call.1} parent=1 // pred_check_branch
      %40 = sbr.rel (0) target = $region17
    $region16: #{tpu_custom_call.1} parent=1 // pred_region
      %42 = dma.done [#allocation4], 128
    $region17: #{tpu_custom_call.1} parent=1 // pred_fallthru
      _
    // Predicated region
    $region18: #{tpu_custom_call.1} parent=1 // pred_check
      _
    $region19: #{tpu_custom_call.1} parent=1 // pred_check_branch
      %44 = sbr.rel (0) target = $region21
    $region20: #{tpu_custom_call.1} parent=1 // pred_region
      %46 = dma.done [#allocation7], 256
    $region21: #{tpu_custom_call.1} parent=1 // pred_fallthru
      _
    %p48 = scmp.eq.s32.totalorder 0, 0
    // Predicated region
    $region22: #{tpu_custom_call.1} parent=1 // pred_check
      %p49 = pneg %p48
    $region23: #{tpu_custom_call.1} parent=1 // pred_check_branch
      %51 = sbr.rel (%p49) target = $region25
    $region24: #{tpu_custom_call.1} parent=1 // pred_region
      %vm52 = vcmask 254976
      %53 = vst.msk [vmem:[#allocation2] sm:$0x3] %vm52, 0.0
    $region25: #{tpu_custom_call.1} parent=1 // pred_fallthru
      _
    %v54 = vld [vmem:[#allocation6] sm:$0xf]
    %v55 = vld [vmem:[#allocation6 + $0x4] sm:$0xf]
    %v56 = vld [vmem:[#allocation6 + $0x8] sm:$0xf]
    %v57 = vld [vmem:[#allocation6 + $0xc] sm:$0xf]
    %v58 = vld [vmem:[%s2] sm:$0x1]
    %v59 = vld [vmem:[#allocation2] sm:$0x3]
    %v60 = vld [vmem:[#allocation3] sm:$0x1]
    %v61 = vld [vmem:[#allocation3 + $0x4] sm:$0x1]
    %v62 = vunpack.c.l.bf16 %v60
    %v63 = vunpack.c.l.bf16 %v61
    %v64 = vpack.c.bf16 %v59, %v59
    %v69 = vunpack.c.l.b16 %v54
    %v70 = vunpack.c.l.b16 %v55
    %v71 = vunpack.c.l.b16 %v56
    %v72 = vunpack.c.l.b16 %v57
    %v73 = vpack.c.b16 %v70, %v69
    %v74 = vpack.c.b16 %v72, %v71
    %vm77 = vcmask 261120
    %v79 = vsel %vm77, %v64, 0
    %81 = vmatpush.bf16.msra.mxu0 0
    %82 = vmatpush.bf16.msra.mxu0 0
    %83 = vmatpush.bf16.msra.mxu0 0
    %84 = vmatpush.bf16.msra.mxu0 0
    %85 = vmatpush.bf16.msra.mxu0 0
    %86 = vmatpush.bf16.msra.mxu0 0
    %87 = vmatpush.bf16.msra.mxu0 %v74
    %88 = vmatpush.bf16.msra.mxu0 %v73
    %89 = vmatmul.bf16.gmra.mxu0 %v79
    %v90 = vpop.f32.mrf.mxu0
    %v91 = vadd.f32 0.0, %v90
    %v92 = vpop.f32.mrf.mxu0
    %93 = vdwg.mxu0
    %v95 = vrot.slane %v91, 1
    %v98 = vadd.f32 %v62, %v91
    %v99 = vadd.f32 %v63, %v95
    %v100 = vxor.u32 %v98, 2147483648
    %v101 = vxor.u32 %v99, 2147483648
    %v102 = vmul.f32 %v100, 1.442695
    %v103 = vpow.pop %v102
    %v104 = vmul.f32 %v101, 1.442695
    %v105 = vpow.pop %v104
    %v106 = vadd.f32 %v103, 1.0
    %v107 = vadd.f32 %v105, 1.0
    %v108 = vrcp.pop %v106
    %v109 = vmul.f32 %v106, %v108
    %v110 = vsub.f32 1.0, %v109
    %v111 = vmul.f32 %v108, %v110
    %v112 = vadd.f32 %v108, %v111
    %vm113 = vweird.f32 %v106
    %vm114 = vweird.f32 %v108
    %vm115 = vmor %vm113, %vm114
    %v116 = vsel %vm115, %v108, %v112
    %v117 = vand.u32 2147483647, %v106
    %vm118 = vcmp.eq.f32.partialorder %v117, 8.507059e+37
    %v119 = vand.u32 %v106, 2147483648
    %v120 = vor.u32 1.1754944e-38, %v119
    %v121 = vsel %vm118, %v120, %v116
    %v122 = vmul.f32 1.0, %v121
    %v123 = vrcp.pop %v107
    %v124 = vmul.f32 %v107, %v123
    %v125 = vsub.f32 1.0, %v124
    %v126 = vmul.f32 %v123, %v125
    %v127 = vadd.f32 %v123, %v126
    %vm128 = vweird.f32 %v107
    %vm129 = vweird.f32 %v123
    %vm130 = vmor %vm128, %vm129
    %v131 = vsel %vm130, %v123, %v127
    %v132 = vand.u32 2147483647, %v107
    %vm133 = vcmp.eq.f32.partialorder %v132, 8.507059e+37
    %v134 = vand.u32 %v107, 2147483648
    %v135 = vor.u32 1.1754944e-38, %v134
    %v136 = vsel %vm133, %v135, %v131
    %v137 = vmul.f32 1.0, %v136
    %v139 = vperm.slane %v58, 0
    %140 = vrot.lane.b32.xlu0 %v139, 64
    %v141 = vpop.permute.xlu0 %140
    %v143 = vadd.f32 %v91, %v141
    %v145 = vrot.slane %v143, 1
    %146 = vrot.lane.b32.xlu0 %v143, 64
    %v147 = vpop.permute.xlu0 %146
    %148 = vrot.lane.b32.xlu0 %v145, 64
    %v149 = vpop.permute.xlu0 %148
    %v152 = vmul.f32 %v122, %v147
    %v153 = vmul.f32 %v137, %v149
    %156 = vrot.lane.b32.xlu0 %v152, 64
    %v157 = vpop.permute.xlu0 %156
    %158 = vrot.lane.b32.xlu0 %v153, 64
    %v159 = vpop.permute.xlu0 %158
    %v162 = vadd.f32 %v62, %v157
    %v163 = vadd.f32 %v63, %v159
    %v164 = vtanh.pop %v162
    %v165 = vtanh.pop %v163
    %v166 = vsub.f32 1.0, %v122
    %v167 = vsub.f32 1.0, %v137
    %170 = vrot.lane.b32.xlu0 %v164, 96
    %v171 = vpop.permute.xlu0 %170
    %172 = vrot.lane.b32.xlu0 %v165, 96
    %v173 = vpop.permute.xlu0 %172
    %v176 = vmul.f32 %v166, %v171
    %v177 = vmul.f32 %v167, %v173
    %v179 = vrot.slane %v59, 1
    %180 = vrot.lane.b32.xlu0 %v59, 32
    %v181 = vpop.permute.xlu0 %180
    %182 = vrot.lane.b32.xlu0 %v179, 32
    %v183 = vpop.permute.xlu0 %182
    %v186 = vmul.f32 %v122, %v181
    %v187 = vmul.f32 %v137, %v183
    %v188 = vadd.f32 %v176, %v186
    %v189 = vadd.f32 %v177, %v187
    %v190 = vmul.f32 %v188, 0.5
    %v191 = vmul.f32 %v189, 0.5
    %v192 = vmul.f32 %v188, 0.044715
    %v193 = vmul.f32 %v189, 0.044715
    %v194 = vmul.f32 %v192, %v188
    %v195 = vmul.f32 %v193, %v189
    %v196 = vmul.f32 %v194, %v188
    %v197 = vmul.f32 %v195, %v189
    %v198 = vadd.f32 %v188, %v196
    %v199 = vadd.f32 %v189, %v197
    %v200 = vmul.f32 %v198, 0.7978846
    %v201 = vmul.f32 %v199, 0.7978846
    %v202 = vtanh.pop %v200
    %v203 = vtanh.pop %v201
    %v204 = vadd.f32 %v202, 1.0
    %v205 = vadd.f32 %v203, 1.0
    %v206 = vmul.f32 %v190, %v204
    %v207 = vmul.f32 %v191, %v205
    %210 = vrot.lane.b32.xlu0 %v206, 96
    %v211 = vpop.permute.xlu0 %210
    %212 = vrot.lane.b32.xlu0 %v207, 96
    %v213 = vpop.permute.xlu0 %212
    %vm216 = vcmask 253952
    %217 = vst.msk [vmem:[#allocation8] sm:$0x1] %vm216, %v211
    %218 = vst.msk [vmem:[#allocation8 + $0x8] sm:$0x1] %vm216, %v213
    %v219 = vld [vmem:[#allocation3] sm:$0x1]
    %v220 = vld [vmem:[#allocation3 + $0x4] sm:$0x1]
    %v221 = vunpack.c.l.bf16 %v219
    %v222 = vunpack.c.l.bf16 %v220
    %v223 = vpack.c.bf16 %v188, %v188
    %v224 = vpack.c.bf16 %v189, %v189
    %v227 = vunpack.c.l.b16 %v223
    %v228 = vunpack.c.l.b16 %v224
    %v229 = vrot.slane %v228, 7
    %vm230 = vcmask 1041409
    %v231 = vsel %vm230, %v229, %v227
    %v232 = vpack.c.b16 %v231, %v231
    %233 = vrot.lane.b32.xlu0 %v232, 96
    %v234 = vpop.permute.xlu0 %233
    %v236 = vsel %vm77, %v234, 0
    %238 = vmatpush.bf16.msra.mxu0 0
    %239 = vmatpush.bf16.msra.mxu0 0
    %240 = vmatpush.bf16.msra.mxu0 0
    %241 = vmatpush.bf16.msra.mxu0 0
    %242 = vmatpush.bf16.msra.mxu0 0
    %243 = vmatpush.bf16.msra.mxu0 0
    %244 = vmatpush.bf16.msra.mxu0 %v74
    %245 = vmatpush.bf16.msra.mxu0 %v73
    %246 = vmatmul.bf16.gmra.mxu0 %v236
    %v247 = vpop.f32.mrf.mxu0
    %v248 = vadd.f32 0.0, %v247
    %v249 = vpop.f32.mrf.mxu0
    %250 = vdwg.mxu0
    %v252 = vrot.slane %v248, 7
    %v255 = vadd.f32 %v221, %v252
    %v256 = vadd.f32 %v222, %v248
    %v257 = vxor.u32 %v255, 2147483648
    %v258 = vxor.u32 %v256, 2147483648
    %v259 = vmul.f32 %v257, 1.442695
    %v260 = vpow.pop %v259
    %v261 = vmul.f32 %v258, 1.442695
    %v262 = vpow.pop %v261
    %v263 = vadd.f32 %v260, 1.0
    %v264 = vadd.f32 %v262, 1.0
    %v265 = vrcp.pop %v263
    %v266 = vmul.f32 %v263, %v265
    %v267 = vsub.f32 1.0, %v266
    %v268 = vmul.f32 %v265, %v267
    %v269 = vadd.f32 %v265, %v268
    %vm270 = vweird.f32 %v263
    %vm271 = vweird.f32 %v265
    %vm272 = vmor %vm270, %vm271
    %v273 = vsel %vm272, %v265, %v269
    %v274 = vand.u32 2147483647, %v263
    %vm275 = vcmp.eq.f32.partialorder %v274, 8.507059e+37
    %v276 = vand.u32 %v263, 2147483648
    %v277 = vor.u32 1.1754944e-38, %v276
    %v278 = vsel %vm275, %v277, %v273
    %v279 = vmul.f32 1.0, %v278
    %v280 = vrcp.pop %v264
    %v281 = vmul.f32 %v264, %v280
    %v282 = vsub.f32 1.0, %v281
    %v283 = vmul.f32 %v280, %v282
    %v284 = vadd.f32 %v280, %v283
    %vm285 = vweird.f32 %v264
    %vm286 = vweird.f32 %v280
    %vm287 = vmor %vm285, %vm286
    %v288 = vsel %vm287, %v280, %v284
    %v289 = vand.u32 2147483647, %v264
    %vm290 = vcmp.eq.f32.partialorder %v289, 8.507059e+37
    %v291 = vand.u32 %v264, 2147483648
    %v292 = vor.u32 1.1754944e-38, %v291
    %v293 = vsel %vm290, %v292, %v288
    %v294 = vmul.f32 1.0, %v293
    %v295 = vadd.f32 %v248, %v141
    %v297 = vrot.slane %v295, 7
    %298 = vrot.lane.b32.xlu0 %v297, 64
    %v299 = vpop.permute.xlu0 %298
    %300 = vrot.lane.b32.xlu0 %v295, 64
    %v301 = vpop.permute.xlu0 %300
    %v304 = vmul.f32 %v279, %v299
    %v305 = vmul.f32 %v294, %v301
    %308 = vrot.lane.b32.xlu0 %v304, 64
    %v309 = vpop.permute.xlu0 %308
    %310 = vrot.lane.b32.xlu0 %v305, 64
    %v311 = vpop.permute.xlu0 %310
    %v314 = vadd.f32 %v221, %v309
    %v315 = vadd.f32 %v222, %v311
    %v316 = vtanh.pop %v314
    %v317 = vtanh.pop %v315
    %v318 = vsub.f32 1.0, %v279
    %v319 = vsub.f32 1.0, %v294
    %322 = vrot.lane.b32.xlu0 %v316, 96
    %v323 = vpop.permute.xlu0 %322
    %324 = vrot.lane.b32.xlu0 %v317, 96
    %v325 = vpop.permute.xlu0 %324
    %v328 = vmul.f32 %v318, %v323
    %v329 = vmul.f32 %v319, %v325
    %v332 = vrot.slane %v188, 7
    %v333 = vrot.slane %v189, 7
    %v336 = vmul.f32 %v279, %v332
    %v337 = vmul.f32 %v294, %v333
    %v338 = vadd.f32 %v328, %v336
    %v339 = vadd.f32 %v329, %v337
    %v340 = vmul.f32 %v338, 0.5
    %v341 = vmul.f32 %v339, 0.5
    %v342 = vmul.f32 %v338, 0.044715
    %v343 = vmul.f32 %v339, 0.044715
    %v344 = vmul.f32 %v342, %v338
    %v345 = vmul.f32 %v343, %v339
    %v346 = vmul.f32 %v344, %v338
    %v347 = vmul.f32 %v345, %v339
    %v348 = vadd.f32 %v338, %v346
    %v349 = vadd.f32 %v339, %v347
    %v350 = vmul.f32 %v348, 0.7978846
    %v351 = vmul.f32 %v349, 0.7978846
    %v352 = vtanh.pop %v350
    %v353 = vtanh.pop %v351
    %v354 = vadd.f32 %v352, 1.0
    %v355 = vadd.f32 %v353, 1.0
    %v356 = vmul.f32 %v340, %v354
    %v357 = vmul.f32 %v341, %v355
    %360 = vrot.lane.b32.xlu0 %v356, 96
    %v361 = vpop.permute.xlu0 %360
    %362 = vrot.lane.b32.xlu0 %v357, 96
    %v363 = vpop.permute.xlu0 %362
    %vm366 = vcmask 254977
    %367 = vst.msk [vmem:[#allocation8] sm:$0x2] %vm366, %v361
    %368 = vst.msk [vmem:[#allocation8 + $0x8] sm:$0x2] %vm366, %v363
    %v369 = vld [vmem:[#allocation3] sm:$0x2]
    %v370 = vld [vmem:[#allocation3 + $0x4] sm:$0x2]
    %v371 = vunpack.c.l.bf16 %v369
    %v372 = vunpack.c.l.bf16 %v370
    %v373 = vpack.c.bf16 %v338, %v338
    %v374 = vpack.c.bf16 %v339, %v339
    %v377 = vunpack.c.l.b16 %v373
    %v378 = vunpack.c.l.b16 %v374
    %v379 = vrot.slane %v377, 1
    %v380 = vsel %vm230, %v378, %v379
    %v381 = vpack.c.b16 %v380, %v380
    %382 = vrot.lane.b32.xlu0 %v381, 96
    %v383 = vpop.permute.xlu0 %382
    %v385 = vsel %vm77, %v383, 0
    %387 = vmatpush.bf16.msra.mxu0 0
    %388 = vmatpush.bf16.msra.mxu0 0
    %389 = vmatpush.bf16.msra.mxu0 0
    %390 = vmatpush.bf16.msra.mxu0 0
    %391 = vmatpush.bf16.msra.mxu0 0
    %392 = vmatpush.bf16.msra.mxu0 0
    %393 = vmatpush.bf16.msra.mxu0 %v74
    %394 = vmatpush.bf16.msra.mxu0 %v73
    %395 = vmatmul.bf16.gmra.mxu0 %v385
    %v396 = vpop.f32.mrf.mxu0
    %v397 = vadd.f32 0.0, %v396
    %v398 = vpop.f32.mrf.mxu0
    %399 = vdwg.mxu0
    %v401 = vrot.slane %v397, 6
    %v402 = vrot.slane %v397, 7
    %v405 = vadd.f32 %v371, %v401
    %v406 = vadd.f32 %v372, %v402
    %v407 = vxor.u32 %v405, 2147483648
    %v408 = vxor.u32 %v406, 2147483648
    %v409 = vmul.f32 %v407, 1.442695
    %v410 = vpow.pop %v409
    %v411 = vmul.f32 %v408, 1.442695
    %v412 = vpow.pop %v411
    %v413 = vadd.f32 %v410, 1.0
    %v414 = vadd.f32 %v412, 1.0
    %v415 = vrcp.pop %v413
    %v416 = vmul.f32 %v413, %v415
    %v417 = vsub.f32 1.0, %v416
    %v418 = vmul.f32 %v415, %v417
    %v419 = vadd.f32 %v415, %v418
    %vm420 = vweird.f32 %v413
    %vm421 = vweird.f32 %v415
    %vm422 = vmor %vm420, %vm421
    %v423 = vsel %vm422, %v415, %v419
    %v424 = vand.u32 2147483647, %v413
    %vm425 = vcmp.eq.f32.partialorder %v424, 8.507059e+37
    %v426 = vand.u32 %v413, 2147483648
    %v427 = vor.u32 1.1754944e-38, %v426
    %v428 = vsel %vm425, %v427, %v423
    %v429 = vmul.f32 1.0, %v428
    %v430 = vrcp.pop %v414
    %v431 = vmul.f32 %v414, %v430
    %v432 = vsub.f32 1.0, %v431
    %v433 = vmul.f32 %v430, %v432
    %v434 = vadd.f32 %v430, %v433
    %vm435 = vweird.f32 %v414
    %vm436 = vweird.f32 %v430
    %vm437 = vmor %vm435, %vm436
    %v438 = vsel %vm437, %v430, %v434
    %v439 = vand.u32 2147483647, %v414
    %vm440 = vcmp.eq.f32.partialorder %v439, 8.507059e+37
    %v441 = vand.u32 %v414, 2147483648
    %v442 = vor.u32 1.1754944e-38, %v441
    %v443 = vsel %vm440, %v442, %v438
    %v444 = vmul.f32 1.0, %v443
    %v445 = vadd.f32 %v397, %v141
    %v447 = vrot.slane %v445, 6
    %v448 = vrot.slane %v445, 7
    %449 = vrot.lane.b32.xlu0 %v447, 64
    %v450 = vpop.permute.xlu0 %449
    %451 = vrot.lane.b32.xlu0 %v448, 64
    %v452 = vpop.permute.xlu0 %451
    %v455 = vmul.f32 %v429, %v450
    %v456 = vmul.f32 %v444, %v452
    %459 = vrot.lane.b32.xlu0 %v455, 64
    %v460 = vpop.permute.xlu0 %459
    %461 = vrot.lane.b32.xlu0 %v456, 64
    %v462 = vpop.permute.xlu0 %461
    %v465 = vadd.f32 %v371, %v460
    %v466 = vadd.f32 %v372, %v462
    %v467 = vtanh.pop %v465
    %v468 = vtanh.pop %v466
    %v469 = vsub.f32 1.0, %v429
    %v470 = vsub.f32 1.0, %v444
    %473 = vrot.lane.b32.xlu0 %v467, 96
    %v474 = vpop.permute.xlu0 %473
    %475 = vrot.lane.b32.xlu0 %v468, 96
    %v476 = vpop.permute.xlu0 %475
    %v479 = vmul.f32 %v469, %v474
    %v480 = vmul.f32 %v470, %v476
    %v483 = vrot.slane %v338, 7
    %v484 = vrot.slane %v339, 7
    %v487 = vmul.f32 %v429, %v483
    %v488 = vmul.f32 %v444, %v484
    %v489 = vadd.f32 %v479, %v487
    %v490 = vadd.f32 %v480, %v488
    %v491 = vmul.f32 %v489, 0.5
    %v492 = vmul.f32 %v490, 0.5
    %v493 = vmul.f32 %v489, 0.044715
    %v494 = vmul.f32 %v490, 0.044715
    %v495 = vmul.f32 %v493, %v489
    %v496 = vmul.f32 %v494, %v490
    %v497 = vmul.f32 %v495, %v489
    %v498 = vmul.f32 %v496, %v490
    %v499 = vadd.f32 %v489, %v497
    %v500 = vadd.f32 %v490, %v498
    %v501 = vmul.f32 %v499, 0.7978846
    %v502 = vmul.f32 %v500, 0.7978846
    %v503 = vtanh.pop %v501
    %v504 = vtanh.pop %v502
    %v505 = vadd.f32 %v503, 1.0
    %v506 = vadd.f32 %v504, 1.0
    %v507 = vmul.f32 %v491, %v505
    %v508 = vmul.f32 %v492, %v506
    %511 = vrot.lane.b32.xlu0 %v507, 96
    %v512 = vpop.permute.xlu0 %511
    %513 = vrot.lane.b32.xlu0 %v508, 96
    %v514 = vpop.permute.xlu0 %513
    %vm517 = vcmask 256002
    %518 = vst.msk [vmem:[#allocation8] sm:$0x4] %vm517, %v512
    %519 = vst.msk [vmem:[#allocation8 + $0x8] sm:$0x4] %vm517, %v514
    %v520 = vld [vmem:[#allocation3] sm:$0x2]
    %v521 = vld [vmem:[#allocation3 + $0x4] sm:$0x2]
    %v522 = vunpack.c.l.bf16 %v520
    %v523 = vunpack.c.l.bf16 %v521
    %v524 = vpack.c.bf16 %v489, %v489
    %v525 = vpack.c.bf16 %v490, %v490
    %v528 = vunpack.c.l.b16 %v524
    %v529 = vunpack.c.l.b16 %v525
    %v530 = vrot.slane %v528, 2
    %v531 = vrot.slane %v529, 1
    %v532 = vsel %vm230, %v531, %v530
    %v533 = vpack.c.b16 %v532, %v532
    %534 = vrot.lane.b32.xlu0 %v533, 96
    %v535 = vpop.permute.xlu0 %534
    %v537 = vsel %vm77, %v535, 0
    %539 = vmatpush.bf16.msra.mxu0 0
    %540 = vmatpush.bf16.msra.mxu0 0
    %541 = vmatpush.bf16.msra.mxu0 0
    %542 = vmatpush.bf16.msra.mxu0 0
    %543 = vmatpush.bf16.msra.mxu0 0
    %544 = vmatpush.bf16.msra.mxu0 0
    %545 = vmatpush.bf16.msra.mxu0 %v74
    %546 = vmatpush.bf16.msra.mxu0 %v73
    %547 = vmatmul.bf16.gmra.mxu0 %v537
    %v548 = vpop.f32.mrf.mxu0
    %v549 = vadd.f32 0.0, %v548
    %v550 = vpop.f32.mrf.mxu0
    %551 = vdwg.mxu0
    %v553 = vrot.slane %v549, 5
    %v554 = vrot.slane %v549, 6
    %v557 = vadd.f32 %v522, %v553
    %v558 = vadd.f32 %v523, %v554
    %v559 = vxor.u32 %v557, 2147483648
    %v560 = vxor.u32 %v558, 2147483648
    %v561 = vmul.f32 %v559, 1.442695
    %v562 = vpow.pop %v561
    %v563 = vmul.f32 %v560, 1.442695
    %v564 = vpow.pop %v563
    %v565 = vadd.f32 %v562, 1.0
    %v566 = vadd.f32 %v564, 1.0
    %v567 = vrcp.pop %v565
    %v568 = vmul.f32 %v565, %v567
    %v569 = vsub.f32 1.0, %v568
    %v570 = vmul.f32 %v567, %v569
    %v571 = vadd.f32 %v567, %v570
    %vm572 = vweird.f32 %v565
    %vm573 = vweird.f32 %v567
    %vm574 = vmor %vm572, %vm573
    %v575 = vsel %vm574, %v567, %v571
    %v576 = vand.u32 2147483647, %v565
    %vm577 = vcmp.eq.f32.partialorder %v576, 8.507059e+37
    %v578 = vand.u32 %v565, 2147483648
    %v579 = vor.u32 1.1754944e-38, %v578
    %v580 = vsel %vm577, %v579, %v575
    %v581 = vmul.f32 1.0, %v580
    %v582 = vrcp.pop %v566
    %v583 = vmul.f32 %v566, %v582
    %v584 = vsub.f32 1.0, %v583
    %v585 = vmul.f32 %v582, %v584
    %v586 = vadd.f32 %v582, %v585
    %vm587 = vweird.f32 %v566
    %vm588 = vweird.f32 %v582
    %vm589 = vmor %vm587, %vm588
    %v590 = vsel %vm589, %v582, %v586
    %v591 = vand.u32 2147483647, %v566
    %vm592 = vcmp.eq.f32.partialorder %v591, 8.507059e+37
    %v593 = vand.u32 %v566, 2147483648
    %v594 = vor.u32 1.1754944e-38, %v593
    %v595 = vsel %vm592, %v594, %v590
    %v596 = vmul.f32 1.0, %v595
    %v597 = vadd.f32 %v549, %v141
    %v599 = vrot.slane %v597, 5
    %v600 = vrot.slane %v597, 6
    %601 = vrot.lane.b32.xlu0 %v599, 64
    %v602 = vpop.permute.xlu0 %601
    %603 = vrot.lane.b32.xlu0 %v600, 64
    %v604 = vpop.permute.xlu0 %603
    %v607 = vmul.f32 %v581, %v602
    %v608 = vmul.f32 %v596, %v604
    %611 = vrot.lane.b32.xlu0 %v607, 64
    %v612 = vpop.permute.xlu0 %611
    %613 = vrot.lane.b32.xlu0 %v608, 64
    %v614 = vpop.permute.xlu0 %613
    %v617 = vadd.f32 %v522, %v612
    %v618 = vadd.f32 %v523, %v614
    %v619 = vtanh.pop %v617
    %v620 = vtanh.pop %v618
    %v621 = vsub.f32 1.0, %v581
    %v622 = vsub.f32 1.0, %v596
    %625 = vrot.lane.b32.xlu0 %v619, 96
    %v626 = vpop.permute.xlu0 %625
    %627 = vrot.lane.b32.xlu0 %v620, 96
    %v628 = vpop.permute.xlu0 %627
    %v631 = vmul.f32 %v621, %v626
    %v632 = vmul.f32 %v622, %v628
    %v635 = vrot.slane %v489, 7
    %v636 = vrot.slane %v490, 7
    %v639 = vmul.f32 %v581, %v635
    %v640 = vmul.f32 %v596, %v636
    %v641 = vadd.f32 %v631, %v639
    %v642 = vadd.f32 %v632, %v640
    %v643 = vmul.f32 %v641, 0.5
    %v644 = vmul.f32 %v642, 0.5
    %v645 = vmul.f32 %v641, 0.044715
    %v646 = vmul.f32 %v642, 0.044715
    %v647 = vmul.f32 %v645, %v641
    %v648 = vmul.f32 %v646, %v642
    %v649 = vmul.f32 %v647, %v641
    %v650 = vmul.f32 %v648, %v642
    %v651 = vadd.f32 %v641, %v649
    %v652 = vadd.f32 %v642, %v650
    %v653 = vmul.f32 %v651, 0.7978846
    %v654 = vmul.f32 %v652, 0.7978846
    %v655 = vtanh.pop %v653
    %v656 = vtanh.pop %v654
    %v657 = vadd.f32 %v655, 1.0
    %v658 = vadd.f32 %v656, 1.0
    %v659 = vmul.f32 %v643, %v657
    %v660 = vmul.f32 %v644, %v658
    %663 = vrot.lane.b32.xlu0 %v659, 96
    %v664 = vpop.permute.xlu0 %663
    %665 = vrot.lane.b32.xlu0 %v660, 96
    %v666 = vpop.permute.xlu0 %665
    %vm669 = vcmask 257027
    %670 = vst.msk [vmem:[#allocation8] sm:$0x8] %vm669, %v664
    %671 = vst.msk [vmem:[#allocation8 + $0x8] sm:$0x8] %vm669, %v666
    %v672 = vld [vmem:[#allocation3] sm:$0x4]
    %v673 = vld [vmem:[#allocation3 + $0x4] sm:$0x4]
    %v674 = vunpack.c.l.bf16 %v672
    %v675 = vunpack.c.l.bf16 %v673
    %v676 = vpack.c.bf16 %v641, %v641
    %v677 = vpack.c.bf16 %v642, %v642
    %v680 = vunpack.c.l.b16 %v676
    %v681 = vunpack.c.l.b16 %v677
    %v682 = vrot.slane %v680, 3
    %v683 = vrot.slane %v681, 2
    %v684 = vsel %vm230, %v683, %v682
    %v685 = vpack.c.b16 %v684, %v684
    %686 = vrot.lane.b32.xlu0 %v685, 96
    %v687 = vpop.permute.xlu0 %686
    %v689 = vsel %vm77, %v687, 0
    %691 = vmatpush.bf16.msra.mxu0 0
    %692 = vmatpush.bf16.msra.mxu0 0
    %693 = vmatpush.bf16.msra.mxu0 0
    %694 = vmatpush.bf16.msra.mxu0 0
    %695 = vmatpush.bf16.msra.mxu0 0
    %696 = vmatpush.bf16.msra.mxu0 0
    %697 = vmatpush.bf16.msra.mxu0 %v74
    %698 = vmatpush.bf16.msra.mxu0 %v73
    %699 = vmatmul.bf16.gmra.mxu0 %v689
    %v700 = vpop.f32.mrf.mxu0
    %v701 = vadd.f32 0.0, %v700
    %v702 = vpop.f32.mrf.mxu0
    %703 = vdwg.mxu0
    %v705 = vrot.slane %v701, 4
    %v706 = vrot.slane %v701, 5
    %v709 = vadd.f32 %v674, %v705
    %v710 = vadd.f32 %v675, %v706
    %v711 = vxor.u32 %v709, 2147483648
    %v712 = vxor.u32 %v710, 2147483648
    %v713 = vmul.f32 %v711, 1.442695
    %v714 = vpow.pop %v713
    %v715 = vmul.f32 %v712, 1.442695
    %v716 = vpow.pop %v715
    %v717 = vadd.f32 %v714, 1.0
    %v718 = vadd.f32 %v716, 1.0
    %v719 = vrcp.pop %v717
    %v720 = vmul.f32 %v717, %v719
    %v721 = vsub.f32 1.0, %v720
    %v722 = vmul.f32 %v719, %v721
    %v723 = vadd.f32 %v719, %v722
    %vm724 = vweird.f32 %v717
    %vm725 = vweird.f32 %v719
    %vm726 = vmor %vm724, %vm725
    %v727 = vsel %vm726, %v719, %v723
    %v728 = vand.u32 2147483647, %v717
    %vm729 = vcmp.eq.f32.partialorder %v728, 8.507059e+37
    %v730 = vand.u32 %v717, 2147483648
    %v731 = vor.u32 1.1754944e-38, %v730
    %v732 = vsel %vm729, %v731, %v727
    %v733 = vmul.f32 1.0, %v732
    %v734 = vrcp.pop %v718
    %v735 = vmul.f32 %v718, %v734
    %v736 = vsub.f32 1.0, %v735
    %v737 = vmul.f32 %v734, %v736
    %v738 = vadd.f32 %v734, %v737
    %vm739 = vweird.f32 %v718
    %vm740 = vweird.f32 %v734
    %vm741 = vmor %vm739, %vm740
    %v742 = vsel %vm741, %v734, %v738
    %v743 = vand.u32 2147483647, %v718
    %vm744 = vcmp.eq.f32.partialorder %v743, 8.507059e+37
    %v745 = vand.u32 %v718, 2147483648
    %v746 = vor.u32 1.1754944e-38, %v745
    %v747 = vsel %vm744, %v746, %v742
    %v748 = vmul.f32 1.0, %v747
    %v749 = vadd.f32 %v701, %v141
    %v751 = vrot.slane %v749, 4
    %v752 = vrot.slane %v749, 5
    %753 = vrot.lane.b32.xlu0 %v751, 64
    %v754 = vpop.permute.xlu0 %753
    %755 = vrot.lane.b32.xlu0 %v752, 64
    %v756 = vpop.permute.xlu0 %755
    %v759 = vmul.f32 %v733, %v754
    %v760 = vmul.f32 %v748, %v756
    %763 = vrot.lane.b32.xlu0 %v759, 64
    %v764 = vpop.permute.xlu0 %763
    %765 = vrot.lane.b32.xlu0 %v760, 64
    %v766 = vpop.permute.xlu0 %765
    %v769 = vadd.f32 %v674, %v764
    %v770 = vadd.f32 %v675, %v766
    %v771 = vtanh.pop %v769
    %v772 = vtanh.pop %v770
    %v773 = vsub.f32 1.0, %v733
    %v774 = vsub.f32 1.0, %v748
    %777 = vrot.lane.b32.xlu0 %v771, 96
    %v778 = vpop.permute.xlu0 %777
    %779 = vrot.lane.b32.xlu0 %v772, 96
    %v780 = vpop.permute.xlu0 %779
    %v783 = vmul.f32 %v773, %v778
    %v784 = vmul.f32 %v774, %v780
    %v787 = vrot.slane %v641, 7
    %v788 = vrot.slane %v642, 7
    %v791 = vmul.f32 %v733, %v787
    %v792 = vmul.f32 %v748, %v788
    %v793 = vadd.f32 %v783, %v791
    %v794 = vadd.f32 %v784, %v792
    %v795 = vmul.f32 %v793, 0.5
    %v796 = vmul.f32 %v794, 0.5
    %v797 = vmul.f32 %v793, 0.044715
    %v798 = vmul.f32 %v794, 0.044715
    %v799 = vmul.f32 %v797, %v793
    %v800 = vmul.f32 %v798, %v794
    %v801 = vmul.f32 %v799, %v793
    %v802 = vmul.f32 %v800, %v794
    %v803 = vadd.f32 %v793, %v801
    %v804 = vadd.f32 %v794, %v802
    %v805 = vmul.f32 %v803, 0.7978846
    %v806 = vmul.f32 %v804, 0.7978846
    %v807 = vtanh.pop %v805
    %v808 = vtanh.pop %v806
    %v809 = vadd.f32 %v807, 1.0
    %v810 = vadd.f32 %v808, 1.0
    %v811 = vmul.f32 %v795, %v809
    %v812 = vmul.f32 %v796, %v810
    %815 = vrot.lane.b32.xlu0 %v811, 96
    %v816 = vpop.permute.xlu0 %815
    %817 = vrot.lane.b32.xlu0 %v812, 96
    %v818 = vpop.permute.xlu0 %817
    %vm821 = vcmask 258052
    %822 = vst.msk [vmem:[#allocation8] sm:$0x10] %vm821, %v816
    %823 = vst.msk [vmem:[#allocation8 + $0x8] sm:$0x10] %vm821, %v818
    %v824 = vld [vmem:[#allocation3] sm:$0x4]
    %v825 = vld [vmem:[#allocation3 + $0x4] sm:$0x4]
    %v826 = vunpack.c.l.bf16 %v824
    %v827 = vunpack.c.l.bf16 %v825
    %v828 = vpack.c.bf16 %v793, %v793
    %v829 = vpack.c.bf16 %v794, %v794
    %v832 = vunpack.c.l.b16 %v828
    %v833 = vunpack.c.l.b16 %v829
    %v834 = vrot.slane %v832, 4
    %v835 = vrot.slane %v833, 3
    %v836 = vsel %vm230, %v835, %v834
    %v837 = vpack.c.b16 %v836, %v836
    %838 = vrot.lane.b32.xlu0 %v837, 96
    %v839 = vpop.permute.xlu0 %838
    %v841 = vsel %vm77, %v839, 0
    %843 = vmatpush.bf16.msra.mxu0 0
    %844 = vmatpush.bf16.msra.mxu0 0
    %845 = vmatpush.bf16.msra.mxu0 0
    %846 = vmatpush.bf16.msra.mxu0 0
    %847 = vmatpush.bf16.msra.mxu0 0
    %848 = vmatpush.bf16.msra.mxu0 0
    %849 = vmatpush.bf16.msra.mxu0 %v74
    %850 = vmatpush.bf16.msra.mxu0 %v73
    %851 = vmatmul.bf16.gmra.mxu0 %v841
    %v852 = vpop.f32.mrf.mxu0
    %v853 = vadd.f32 0.0, %v852
    %v854 = vpop.f32.mrf.mxu0
    %855 = vdwg.mxu0
    %v857 = vrot.slane %v853, 3
    %v858 = vrot.slane %v853, 4
    %v861 = vadd.f32 %v826, %v857
    %v862 = vadd.f32 %v827, %v858
    %v863 = vxor.u32 %v861, 2147483648
    %v864 = vxor.u32 %v862, 2147483648
    %v865 = vmul.f32 %v863, 1.442695
    %v866 = vpow.pop %v865
    %v867 = vmul.f32 %v864, 1.442695
    %v868 = vpow.pop %v867
    %v869 = vadd.f32 %v866, 1.0
    %v870 = vadd.f32 %v868, 1.0
    %v871 = vrcp.pop %v869
    %v872 = vmul.f32 %v869, %v871
    %v873 = vsub.f32 1.0, %v872
    %v874 = vmul.f32 %v871, %v873
    %v875 = vadd.f32 %v871, %v874
    %vm876 = vweird.f32 %v869
    %vm877 = vweird.f32 %v871
    %vm878 = vmor %vm876, %vm877
    %v879 = vsel %vm878, %v871, %v875
    %v880 = vand.u32 2147483647, %v869
    %vm881 = vcmp.eq.f32.partialorder %v880, 8.507059e+37
    %v882 = vand.u32 %v869, 2147483648
    %v883 = vor.u32 1.1754944e-38, %v882
    %v884 = vsel %vm881, %v883, %v879
    %v885 = vmul.f32 1.0, %v884
    %v886 = vrcp.pop %v870
    %v887 = vmul.f32 %v870, %v886
    %v888 = vsub.f32 1.0, %v887
    %v889 = vmul.f32 %v886, %v888
    %v890 = vadd.f32 %v886, %v889
    %vm891 = vweird.f32 %v870
    %vm892 = vweird.f32 %v886
    %vm893 = vmor %vm891, %vm892
    %v894 = vsel %vm893, %v886, %v890
    %v895 = vand.u32 2147483647, %v870
    %vm896 = vcmp.eq.f32.partialorder %v895, 8.507059e+37
    %v897 = vand.u32 %v870, 2147483648
    %v898 = vor.u32 1.1754944e-38, %v897
    %v899 = vsel %vm896, %v898, %v894
    %v900 = vmul.f32 1.0, %v899
    %v901 = vadd.f32 %v853, %v141
    %v903 = vrot.slane %v901, 3
    %v904 = vrot.slane %v901, 4
    %905 = vrot.lane.b32.xlu0 %v903, 64
    %v906 = vpop.permute.xlu0 %905
    %907 = vrot.lane.b32.xlu0 %v904, 64
    %v908 = vpop.permute.xlu0 %907
    %v911 = vmul.f32 %v885, %v906
    %v912 = vmul.f32 %v900, %v908
    %915 = vrot.lane.b32.xlu0 %v911, 64
    %v916 = vpop.permute.xlu0 %915
    %917 = vrot.lane.b32.xlu0 %v912, 64
    %v918 = vpop.permute.xlu0 %917
    %v921 = vadd.f32 %v826, %v916
    %v922 = vadd.f32 %v827, %v918
    %v923 = vtanh.pop %v921
    %v924 = vtanh.pop %v922
    %v925 = vsub.f32 1.0, %v885
    %v926 = vsub.f32 1.0, %v900
    %929 = vrot.lane.b32.xlu0 %v923, 96
    %v930 = vpop.permute.xlu0 %929
    %931 = vrot.lane.b32.xlu0 %v924, 96
    %v932 = vpop.permute.xlu0 %931
    %v935 = vmul.f32 %v925, %v930
    %v936 = vmul.f32 %v926, %v932
    %v939 = vrot.slane %v793, 7
    %v940 = vrot.slane %v794, 7
    %v943 = vmul.f32 %v885, %v939
    %v944 = vmul.f32 %v900, %v940
    %v945 = vadd.f32 %v935, %v943
    %v946 = vadd.f32 %v936, %v944
    %v947 = vmul.f32 %v945, 0.5
    %v948 = vmul.f32 %v946, 0.5
    %v949 = vmul.f32 %v945, 0.044715
    %v950 = vmul.f32 %v946, 0.044715
    %v951 = vmul.f32 %v949, %v945
    %v952 = vmul.f32 %v950, %v946
    %v953 = vmul.f32 %v951, %v945
    %v954 = vmul.f32 %v952, %v946
    %v955 = vadd.f32 %v945, %v953
    %v956 = vadd.f32 %v946, %v954
    %v957 = vmul.f32 %v955, 0.7978846
    %v958 = vmul.f32 %v956, 0.7978846
    %v959 = vtanh.pop %v957
    %v960 = vtanh.pop %v958
    %v961 = vadd.f32 %v959, 1.0
    %v962 = vadd.f32 %v960, 1.0
    %v963 = vmul.f32 %v947, %v961
    %v964 = vmul.f32 %v948, %v962
    %967 = vrot.lane.b32.xlu0 %v963, 96
    %v968 = vpop.permute.xlu0 %967
    %969 = vrot.lane.b32.xlu0 %v964, 96
    %v970 = vpop.permute.xlu0 %969
    %vm973 = vcmask 259077
    %974 = vst.msk [vmem:[#allocation8] sm:$0x20] %vm973, %v968
    %975 = vst.msk [vmem:[#allocation8 + $0x8] sm:$0x20] %vm973, %v970
    %v976 = vld [vmem:[#allocation3] sm:$0x8]
    %v977 = vld [vmem:[#allocation3 + $0x4] sm:$0x8]
    %v978 = vunpack.c.l.bf16 %v976
    %v979 = vunpack.c.l.bf16 %v977
    %v980 = vpack.c.bf16 %v945, %v945
    %v981 = vpack.c.bf16 %v946, %v946
    %v984 = vunpack.c.l.b16 %v980
    %v985 = vunpack.c.l.b16 %v981
    %v986 = vrot.slane %v984, 5
    %v987 = vrot.slane %v985, 4
    %v988 = vsel %vm230, %v987, %v986
    %v989 = vpack.c.b16 %v988, %v988
    %990 = vrot.lane.b32.xlu0 %v989, 96
    %v991 = vpop.permute.xlu0 %990
    %v993 = vsel %vm77, %v991, 0
    %995 = vmatpush.bf16.msra.mxu0 0
    %996 = vmatpush.bf16.msra.mxu0 0
    %997 = vmatpush.bf16.msra.mxu0 0
    %998 = vmatpush.bf16.msra.mxu0 0
    %999 = vmatpush.bf16.msra.mxu0 0
    %1000 = vmatpush.bf16.msra.mxu0 0
    %1001 = vmatpush.bf16.msra.mxu0 %v74
    %1002 = vmatpush.bf16.msra.mxu0 %v73
    %1003 = vmatmul.bf16.gmra.mxu0 %v993
    %v1004 = vpop.f32.mrf.mxu0
    %v1005 = vadd.f32 0.0, %v1004
    %v1006 = vpop.f32.mrf.mxu0
    %1007 = vdwg.mxu0
    %v1009 = vrot.slane %v1005, 2
    %v1010 = vrot.slane %v1005, 3
    %v1013 = vadd.f32 %v978, %v1009
    %v1014 = vadd.f32 %v979, %v1010
    %v1015 = vxor.u32 %v1013, 2147483648
    %v1016 = vxor.u32 %v1014, 2147483648
    %v1017 = vmul.f32 %v1015, 1.442695
    %v1018 = vpow.pop %v1017
    %v1019 = vmul.f32 %v1016, 1.442695
    %v1020 = vpow.pop %v1019
    %v1021 = vadd.f32 %v1018, 1.0
    %v1022 = vadd.f32 %v1020, 1.0
    %v1023 = vrcp.pop %v1021
    %v1024 = vmul.f32 %v1021, %v1023
    %v1025 = vsub.f32 1.0, %v1024
    %v1026 = vmul.f32 %v1023, %v1025
    %v1027 = vadd.f32 %v1023, %v1026
    %vm1028 = vweird.f32 %v1021
    %vm1029 = vweird.f32 %v1023
    %vm1030 = vmor %vm1028, %vm1029
    %v1031 = vsel %vm1030, %v1023, %v1027
    %v1032 = vand.u32 2147483647, %v1021
    %vm1033 = vcmp.eq.f32.partialorder %v1032, 8.507059e+37
    %v1034 = vand.u32 %v1021, 2147483648
    %v1035 = vor.u32 1.1754944e-38, %v1034
    %v1036 = vsel %vm1033, %v1035, %v1031
    %v1037 = vmul.f32 1.0, %v1036
    %v1038 = vrcp.pop %v1022
    %v1039 = vmul.f32 %v1022, %v1038
    %v1040 = vsub.f32 1.0, %v1039
    %v1041 = vmul.f32 %v1038, %v1040
    %v1042 = vadd.f32 %v1038, %v1041
    %vm1043 = vweird.f32 %v1022
    %vm1044 = vweird.f32 %v1038
    %vm1045 = vmor %vm1043, %vm1044
    %v1046 = vsel %vm1045, %v1038, %v1042
    %v1047 = vand.u32 2147483647, %v1022
    %vm1048 = vcmp.eq.f32.partialorder %v1047, 8.507059e+37
    %v1049 = vand.u32 %v1022, 2147483648
    %v1050 = vor.u32 1.1754944e-38, %v1049
    %v1051 = vsel %vm1048, %v1050, %v1046
    %v1052 = vmul.f32 1.0, %v1051
    %v1053 = vadd.f32 %v1005, %v141
    %v1055 = vrot.slane %v1053, 2
    %v1056 = vrot.slane %v1053, 3
    %1057 = vrot.lane.b32.xlu0 %v1055, 64
    %v1058 = vpop.permute.xlu0 %1057
    %1059 = vrot.lane.b32.xlu0 %v1056, 64
    %v1060 = vpop.permute.xlu0 %1059
    %v1063 = vmul.f32 %v1037, %v1058
    %v1064 = vmul.f32 %v1052, %v1060
    %1067 = vrot.lane.b32.xlu0 %v1063, 64
    %v1068 = vpop.permute.xlu0 %1067
    %1069 = vrot.lane.b32.xlu0 %v1064, 64
    %v1070 = vpop.permute.xlu0 %1069
    %v1073 = vadd.f32 %v978, %v1068
    %v1074 = vadd.f32 %v979, %v1070
    %v1075 = vtanh.pop %v1073
    %v1076 = vtanh.pop %v1074
    %v1077 = vsub.f32 1.0, %v1037
    %v1078 = vsub.f32 1.0, %v1052
    %1081 = vrot.lane.b32.xlu0 %v1075, 96
    %v1082 = vpop.permute.xlu0 %1081
    %1083 = vrot.lane.b32.xlu0 %v1076, 96
    %v1084 = vpop.permute.xlu0 %1083
    %v1087 = vmul.f32 %v1077, %v1082
    %v1088 = vmul.f32 %v1078, %v1084
    %v1091 = vrot.slane %v945, 7
    %v1092 = vrot.slane %v946, 7
    %v1095 = vmul.f32 %v1037, %v1091
    %v1096 = vmul.f32 %v1052, %v1092
    %v1097 = vadd.f32 %v1087, %v1095
    %v1098 = vadd.f32 %v1088, %v1096
    %v1099 = vmul.f32 %v1097, 0.5
    %v1100 = vmul.f32 %v1098, 0.5
    %v1101 = vmul.f32 %v1097, 0.044715
    %v1102 = vmul.f32 %v1098, 0.044715
    %v1103 = vmul.f32 %v1101, %v1097
    %v1104 = vmul.f32 %v1102, %v1098
    %v1105 = vmul.f32 %v1103, %v1097
    %v1106 = vmul.f32 %v1104, %v1098
    %v1107 = vadd.f32 %v1097, %v1105
    %v1108 = vadd.f32 %v1098, %v1106
    %v1109 = vmul.f32 %v1107, 0.7978846
    %v1110 = vmul.f32 %v1108, 0.7978846
    %v1111 = vtanh.pop %v1109
    %v1112 = vtanh.pop %v1110
    %v1113 = vadd.f32 %v1111, 1.0
    %v1114 = vadd.f32 %v1112, 1.0
    %v1115 = vmul.f32 %v1099, %v1113
    %v1116 = vmul.f32 %v1100, %v1114
    %1119 = vrot.lane.b32.xlu0 %v1115, 96
    %v1120 = vpop.permute.xlu0 %1119
    %1121 = vrot.lane.b32.xlu0 %v1116, 96
    %v1122 = vpop.permute.xlu0 %1121
    %vm1125 = vcmask 260102
    %1126 = vst.msk [vmem:[#allocation8] sm:$0x40] %vm1125, %v1120
    %1127 = vst.msk [vmem:[#allocation8 + $0x8] sm:$0x40] %vm1125, %v1122
    %v1128 = vld [vmem:[#allocation3] sm:$0x8]
    %v1129 = vld [vmem:[#allocation3 + $0x4] sm:$0x8]
    %v1130 = vunpack.c.l.bf16 %v1128
    %v1131 = vunpack.c.l.bf16 %v1129
    %v1132 = vpack.c.bf16 %v1097, %v1097
    %v1133 = vpack.c.bf16 %v1098, %v1098
    %v1136 = vunpack.c.l.b16 %v1132
    %v1137 = vunpack.c.l.b16 %v1133
    %v1138 = vrot.slane %v1136, 6
    %v1139 = vrot.slane %v1137, 5
    %v1140 = vsel %vm230, %v1139, %v1138
    %v1141 = vpack.c.b16 %v1140, %v1140
    %1142 = vrot.lane.b32.xlu0 %v1141, 96
    %v1143 = vpop.permute.xlu0 %1142
    %v1145 = vsel %vm77, %v1143, 0
    %1147 = vmatpush.bf16.msra.mxu0 0
    %1148 = vmatpush.bf16.msra.mxu0 0
    %1149 = vmatpush.bf16.msra.mxu0 0
    %1150 = vmatpush.bf16.msra.mxu0 0
    %1151 = vmatpush.bf16.msra.mxu0 0
    %1152 = vmatpush.bf16.msra.mxu0 0
    %1153 = vmatpush.bf16.msra.mxu0 %v74
    %1154 = vmatpush.bf16.msra.mxu0 %v73
    %1155 = vmatmul.bf16.gmra.mxu0 %v1145
    %v1156 = vpop.f32.mrf.mxu0
    %v1157 = vadd.f32 0.0, %v1156
    %v1158 = vpop.f32.mrf.mxu0
    %1159 = vdwg.mxu0
    %v1161 = vrot.slane %v1157, 1
    %v1162 = vrot.slane %v1157, 2
    %v1165 = vadd.f32 %v1130, %v1161
    %v1166 = vadd.f32 %v1131, %v1162
    %v1167 = vxor.u32 %v1165, 2147483648
    %v1168 = vxor.u32 %v1166, 2147483648
    %v1169 = vmul.f32 %v1167, 1.442695
    %v1170 = vpow.pop %v1169
    %v1171 = vmul.f32 %v1168, 1.442695
    %v1172 = vpow.pop %v1171
    %v1173 = vadd.f32 %v1170, 1.0
    %v1174 = vadd.f32 %v1172, 1.0
    %v1175 = vrcp.pop %v1173
    %v1176 = vmul.f32 %v1173, %v1175
    %v1177 = vsub.f32 1.0, %v1176
    %v1178 = vmul.f32 %v1175, %v1177
    %v1179 = vadd.f32 %v1175, %v1178
    %vm1180 = vweird.f32 %v1173
    %vm1181 = vweird.f32 %v1175
    %vm1182 = vmor %vm1180, %vm1181
    %v1183 = vsel %vm1182, %v1175, %v1179
    %v1184 = vand.u32 2147483647, %v1173
    %vm1185 = vcmp.eq.f32.partialorder %v1184, 8.507059e+37
    %v1186 = vand.u32 %v1173, 2147483648
    %v1187 = vor.u32 1.1754944e-38, %v1186
    %v1188 = vsel %vm1185, %v1187, %v1183
    %v1189 = vmul.f32 1.0, %v1188
    %v1190 = vrcp.pop %v1174
    %v1191 = vmul.f32 %v1174, %v1190
    %v1192 = vsub.f32 1.0, %v1191
    %v1193 = vmul.f32 %v1190, %v1192
    %v1194 = vadd.f32 %v1190, %v1193
    %vm1195 = vweird.f32 %v1174
    %vm1196 = vweird.f32 %v1190
    %vm1197 = vmor %vm1195, %vm1196
    %v1198 = vsel %vm1197, %v1190, %v1194
    %v1199 = vand.u32 2147483647, %v1174
    %vm1200 = vcmp.eq.f32.partialorder %v1199, 8.507059e+37
    %v1201 = vand.u32 %v1174, 2147483648
    %v1202 = vor.u32 1.1754944e-38, %v1201
    %v1203 = vsel %vm1200, %v1202, %v1198
    %v1204 = vmul.f32 1.0, %v1203
    %v1205 = vadd.f32 %v1157, %v141
    %v1207 = vrot.slane %v1205, 1
    %v1208 = vrot.slane %v1205, 2
    %1209 = vrot.lane.b32.xlu0 %v1207, 64
    %v1210 = vpop.permute.xlu0 %1209
    %1211 = vrot.lane.b32.xlu0 %v1208, 64
    %v1212 = vpop.permute.xlu0 %1211
    %v1215 = vmul.f32 %v1189, %v1210
    %v1216 = vmul.f32 %v1204, %v1212
    %1219 = vrot.lane.b32.xlu0 %v1215, 64
    %v1220 = vpop.permute.xlu0 %1219
    %1221 = vrot.lane.b32.xlu0 %v1216, 64
    %v1222 = vpop.permute.xlu0 %1221
    %v1225 = vadd.f32 %v1130, %v1220
    %v1226 = vadd.f32 %v1131, %v1222
    %v1227 = vtanh.pop %v1225
    %v1228 = vtanh.pop %v1226
    %v1229 = vsub.f32 1.0, %v1189
    %v1230 = vsub.f32 1.0, %v1204
    %1233 = vrot.lane.b32.xlu0 %v1227, 96
    %v1234 = vpop.permute.xlu0 %1233
    %1235 = vrot.lane.b32.xlu0 %v1228, 96
    %v1236 = vpop.permute.xlu0 %1235
    %v1239 = vmul.f32 %v1229, %v1234
    %v1240 = vmul.f32 %v1230, %v1236
    %v1243 = vrot.slane %v1097, 7
    %v1244 = vrot.slane %v1098, 7
    %v1247 = vmul.f32 %v1189, %v1243
    %v1248 = vmul.f32 %v1204, %v1244
    %v1249 = vadd.f32 %v1239, %v1247
    %v1250 = vadd.f32 %v1240, %v1248
    %v1251 = vmul.f32 %v1249, 0.5
    %v1252 = vmul.f32 %v1250, 0.5
    %v1253 = vmul.f32 %v1249, 0.044715
    %v1254 = vmul.f32 %v1250, 0.044715
    %v1255 = vmul.f32 %v1253, %v1249
    %v1256 = vmul.f32 %v1254, %v1250
    %v1257 = vmul.f32 %v1255, %v1249
    %v1258 = vmul.f32 %v1256, %v1250
    %v1259 = vadd.f32 %v1249, %v1257
    %v1260 = vadd.f32 %v1250, %v1258
    %v1261 = vmul.f32 %v1259, 0.7978846
    %v1262 = vmul.f32 %v1260, 0.7978846
    %v1263 = vtanh.pop %v1261
    %v1264 = vtanh.pop %v1262
    %v1265 = vadd.f32 %v1263, 1.0
    %v1266 = vadd.f32 %v1264, 1.0
    %v1267 = vmul.f32 %v1251, %v1265
    %v1268 = vmul.f32 %v1252, %v1266
    %1271 = vrot.lane.b32.xlu0 %v1267, 96
    %v1272 = vpop.permute.xlu0 %1271
    %1273 = vrot.lane.b32.xlu0 %v1268, 96
    %v1274 = vpop.permute.xlu0 %1273
    %vm1277 = vcmask 261127
    %1278 = vst.msk [vmem:[#allocation8] sm:$0x80] %vm1277, %v1272
    %1279 = vst.msk [vmem:[#allocation8 + $0x8] sm:$0x80] %vm1277, %v1274
    %v1282 = vrot.slane %v1250, 7
    %1283 = vrot.lane.b32.xlu0 %v1249, 96
    %v1284 = vpop.permute.xlu0 %1283
    %1285 = vrot.lane.b32.xlu0 %v1282, 96
    %v1286 = vpop.permute.xlu0 %1285
    %1289 = vst.msk [vmem:[#allocation2 - $0x7] sm:$0x80] %vm1277, %v1284
    %1290 = vst.msk [vmem:[#allocation2 + $0x1] sm:$0x1] %vm216, %v1286
    // Predicated region
    $region26: #{tpu_custom_call.1} parent=1 // pred_check
      _
    $region27: #{tpu_custom_call.1} parent=1 // pred_check_branch
      %1292 = sbr.rel (0) target = $region29
    $region28: #{tpu_custom_call.1} parent=1 // pred_region
      %1294 = vsyncadd [#allocation5], 0
      %s1295 = sshll.u32 [#allocation8], 4
      %s1296 = int_to_ptr.vmem [resolvable:$true] %s1295
      %s1297 = sshll.u32 %s3, 4
      %s1298 = int_to_ptr.hbm [resolvable:$true] %s1297
      %1303 = dma.vmem_to_hbm [thread:$0]  %s1296, 256, %s1298, [#allocation5], 128, 128, 8
    $region29: #{tpu_custom_call.1} parent=1 // pred_fallthru
      _
    // Predicated region
    $region30: #{tpu_custom_call.1} parent=1 // pred_check
      _
    $region31: #{tpu_custom_call.1} parent=1 // pred_check_branch
      %1305 = sbr.rel (0) target = $region33
    $region32: #{tpu_custom_call.1} parent=1 // pred_region
      %1307 = dma.done [#allocation5], 256
    $region33: #{tpu_custom_call.1} parent=1 // pred_fallthru
      _
    %1308 = vsyncpa [#allocation4], 1
    %1309 = vsyncpa [#allocation7], 1
    %1310 = vsyncpa [#allocation5], 1

</llo_original>
